<compile_context>
chip_gen: v7x
topology: tpu7x:2x2x1
jax: 0.10.0
libtpu: 0.0.40
codegen_flags: <defaults>
</compile_context>

<pallas_src>
import functools

import jax
import jax.numpy as jnp
from jax import lax
from jax.experimental import pallas as pl
from jax.experimental.pallas import tpu as pltpu

_NEG_INF = -1e30   # large finite negative: no inf/NaN in the online softmax


@functools.lru_cache(maxsize=None)
def _vmem_limit_bytes():
    """~3/4 of this chip's VMEM (v5e/v6e: 96 MiB cap, v7x: 48 MiB), safe fallback."""
    try:
        cap = pltpu.get_tpu_info().vmem_capacity_bytes
    except Exception:
        cap = 64 * 1024 * 1024
    return min(int(cap * 3 // 4), 100 * 1024 * 1024)


def _pick_tile(dim, target, align):
    """Largest multiple of `align` that divides `dim` and is <= target, else `dim`."""
    if dim <= target:
        return dim
    t = (target // align) * align
    while t >= align:
        if dim % t == 0:
            return t
        t -= align
    return dim


# ----------------------------- tiled linear (y = x @ W^T) -----------------------------
def _matmul_kernel(x_ref, w_ref, o_ref, acc_ref):
    @pl.when(pl.program_id(2) == 0)
    def _init():
        acc_ref[...] = jnp.zeros(acc_ref.shape, acc_ref.dtype)

    # x block (tm, tk) bf16, w block (tn, tk) bf16 -> (tm, tn) f32; contract dim 1.
    acc_ref[...] += lax.dot_general(
        x_ref[...], w_ref[...],
        dimension_numbers=(((1,), (1,)), ((), ())),
        preferred_element_type=jnp.float32,
    )

    @pl.when(pl.program_id(2) == pl.num_programs(2) - 1)
    def _finalize():
        o_ref[...] = acc_ref[...].astype(o_ref.dtype)


def linear(x_2d, w, out_dtype):
    """y = x_2d @ w.T with w in PyTorch nn.Linear (out, in) layout (bf16 operands)."""
    M, K = x_2d.shape
    N = w.shape[0]
    tm = _pick_tile(M, 512, 16)
    tn = _pick_tile(N, 512, 128)
    tk = _pick_tile(K, 512, 128)
    grid = (M // tm, N // tn, K // tk)
    return pl.pallas_call(
        _matmul_kernel,
        out_shape=jax.ShapeDtypeStruct((M, N), out_dtype),
        grid=grid,
        in_specs=[
            pl.BlockSpec((tm, tk), lambda i, j, k: (i, k)),
            pl.BlockSpec((tn, tk), lambda i, j, k: (j, k)),
        ],
        out_specs=pl.BlockSpec((tm, tn), lambda i, j, k: (i, j)),
        scratch_shapes=[pltpu.VMEM((tm, tn), jnp.float32)],
        compiler_params=pltpu.CompilerParams(
            dimension_semantics=("parallel", "parallel", "arbitrary"),
            vmem_limit_bytes=_vmem_limit_bytes(),
        ),
    )(x_2d, w)


# ------------------------------ RoPE kernel (K heads) ---------------------------------
def _rope_kernel(x_ref, cos_ref, sin_ref, o_ref):
    # x block (1, J, tT, D), half-split per-head layout ([even dims | odd dims]);
    # cos/sin blocks (tT, D/2).
    x = x_ref[0].astype(jnp.float32)        # (J, tT, D)
    d2 = cos_ref.shape[-1]
    x1, x2 = x[..., :d2], x[..., d2:]
    c, s = cos_ref[...], sin_ref[...]
    o_ref[0] = jnp.concatenate([x1 * c - x2 * s, x2 * c + x1 * s],
                               axis=-1).astype(o_ref.dtype)


def apply_rope(x_BJTD, cos_half, sin_half, out_dtype=jnp.bfloat16):
    B, J, T, D = x_BJTD.shape
    tT = _pick_tile(T, 512, 16)
    grid = (B, T // tT)
    return pl.pallas_call(
        _rope_kernel,
        out_shape=jax.ShapeDtypeStruct((B, J, T, D), out_dtype),
        grid=grid,
        in_specs=[
            pl.BlockSpec((1, J, tT, D), lambda b, t: (b, 0, t, 0)),
            pl.BlockSpec((tT, D // 2), lambda b, t: (t, 0)),
            pl.BlockSpec((tT, D // 2), lambda b, t: (t, 0)),
        ],
        out_specs=pl.BlockSpec((1, J, tT, D), lambda b, t: (b, 0, t, 0)),
        compiler_params=pltpu.CompilerParams(
            dimension_semantics=("parallel", "parallel"),
            vmem_limit_bytes=_vmem_limit_bytes(),
        ),
    )(x_BJTD, cos_half, sin_half)


# ----------------------- flash causal GQA attention (group-folded) --------------------
def _flash_kernel(q_ref, k_ref, v_ref, cos_ref, sin_ref, o_ref,
                  m_sc, l_sc, acc_sc, qr_sc):
    qi = pl.program_id(2)
    ki = pl.program_id(3)
    nk = pl.num_programs(3)
    _, G, tq, D = q_ref.shape
    tk = k_ref.shape[2]
    d2 = cos_ref.shape[-1]

    @pl.when(ki == 0)
    def _init():
        # RoPE (+1/sqrt(D) scale folded into cos/sin) applied ONCE per (b,j,qi)
        # to the resident q tile; stored as bf16 for the MXU.
        q = q_ref[0].astype(jnp.float32)                    # (G, tq, D)
        c, s = cos_ref[...], sin_ref[...]                   # (tq, D/2)
        q1, q2 = q[..., :d2], q[..., d2:]
        qrot = jnp.concatenate([q1 * c - q2 * s, q2 * c + q1 * s], axis=-1)
        qr_sc[...] = qrot.reshape(G * tq, D).astype(qr_sc.dtype)
        m_sc[...] = jnp.full(m_sc.shape, _NEG_INF, m_sc.dtype)
        l_sc[...] = jnp.zeros(l_sc.shape, l_sc.dtype)
        acc_sc[...] = jnp.zeros(acc_sc.shape, acc_sc.dtype)

    def _update(masked):
        q = qr_sc[...]                                      # (G*tq, D) bf16
        k = k_ref[0, 0]                                     # (tk, D)   bf16
        v = v_ref[0, 0]                                     # (tk, D)   bf16
        s = lax.dot_general(q, k, (((1,), (1,)), ((), ())),
                            preferred_element_type=jnp.float32)   # (G*tq, tk) f32
        if masked:   # diagonal tile only: build the causal mask
            r = lax.broadcasted_iota(jnp.int32, s.shape, 0)
            qpos = qi * tq + (r % tq)
            kpos = ki * tk + lax.broadcasted_iota(jnp.int32, s.shape, 1)
            s = jnp.where(qpos >= kpos, s, _NEG_INF)
        m_prev = m_sc[...]
        m_new = jnp.maximum(m_prev, jnp.max(s, axis=-1, keepdims=True))
        alpha = jnp.exp(m_prev - m_new)
        p = jnp.exp(s - m_new)
        l_sc[...] = alpha * l_sc[...] + jnp.sum(p, axis=-1, keepdims=True)
        acc_sc[...] = alpha * acc_sc[...] + jnp.dot(
            p.astype(v.dtype), v, preferred_element_type=jnp.float32)
        m_sc[...] = m_new

    @pl.when(ki < qi)      # strictly below the diagonal: fully unmasked tile
    def _full():
        _update(masked=False)

    @pl.when(ki == qi)     # diagonal tile: apply the causal mask
    def _diag():
        _update(masked=True)

    @pl.when(ki == nk - 1)
    def _finalize():
        inv = pl.reciprocal(l_sc[...], approx=True)
        o_ref[0] = (acc_sc[...] * inv).reshape(G, tq, D).astype(o_ref.dtype)


def gqa_flash_attention(q_BHTD, k_BJTD, v_BJTD, cos_half_scaled, sin_half_scaled):
    B, H, T, D = q_BHTD.shape
    J = k_BJTD.shape[1]
    assert H % J == 0
    G = H // J
    assert T % 8 == 0, "sequence length must be a multiple of 8"
    t = _pick_tile(T, 512, 16)        # tq == tkv (causal tile-skip relies on this)
    if T > 512 and t == T:
        raise ValueError("no 16-aligned tile divisor of T <= 512; pad the sequence")
    n = T // t
    grid = (B, J, n, n)
    return pl.pallas_call(
        _flash_kernel,
        out_shape=jax.ShapeDtypeStruct((B, H, T, D), jnp.bfloat16),
        grid=grid,
        in_specs=[
            # All G query heads of KV-group j in one block.
            pl.BlockSpec((1, G, t, D), lambda b, j, qi, ki: (b, j, qi, 0)),
            # K/V: clamp to the causal region so masked-off tiles repeat the
            # previous block index and their DMAs are elided.
            pl.BlockSpec((1, 1, t, D),
                         lambda b, j, qi, ki: (b, j, jnp.minimum(ki, qi), 0)),
            pl.BlockSpec((1, 1, t, D),
                         lambda b, j, qi, ki: (b, j, jnp.minimum(ki, qi), 0)),
            pl.BlockSpec((t, D // 2), lambda b, j, qi, ki: (qi, 0)),
            pl.BlockSpec((t, D // 2), lambda b, j, qi, ki: (qi, 0)),
        ],
        out_specs=pl.BlockSpec((1, G, t, D), lambda b, j, qi, ki: (b, j, qi, 0)),
        scratch_shapes=[
            pltpu.VMEM((G * t, 1), jnp.float32),    # running max m
            pltpu.VMEM((G * t, 1), jnp.float32),    # running denom l
            pltpu.VMEM((G * t, D), jnp.float32),    # output accumulator
            pltpu.VMEM((G * t, D), jnp.bfloat16),   # RoPE'd + scaled q tile
        ],
        compiler_params=pltpu.CompilerParams(
            dimension_semantics=("parallel", "parallel", "parallel", "arbitrary"),
            vmem_limit_bytes=_vmem_limit_bytes(),
        ),
    )(q_BHTD, k_BJTD, v_BJTD, cos_half_scaled, sin_half_scaled)


# ----------------------------------- module wrapper -----------------------------------
def _half_split_qkv_weight(w, E, d_kv, d_head):
    """Permute q/k output rows of attn_proj_w so each head is [even dims | odd dims].

    Makes the interleaved-pair RoPE a contiguous half rotation.  Scores are
    invariant (same permutation on q and k); v/output rows untouched.  In
    production this is done once at weight-load time.
    """
    def half_split(rows):
        idx = jnp.arange(rows.shape[0]).reshape(-1, d_head)
        perm = jnp.concatenate([idx[:, 0::2], idx[:, 1::2]], axis=1).reshape(-1)
        return rows[perm]

    wq = half_split(w[:E])
    wk = half_split(w[E:E + d_kv])
    wv = w[E + d_kv:]
    return jnp.concatenate([wq, wk, wv], axis=0)


def gqa_forward(params, x_BTE, freq_cis_TFC, n_heads, n_kv_heads):
    B, T, E = x_BTE.shape
    assert E % n_heads == 0 and n_heads % n_kv_heads == 0
    d_head = E // n_heads
    d_kv = n_kv_heads * d_head
    scale = 1.0 / (d_head ** 0.5)

    # bf16 weights / activations at the HBM boundary (f32 accumulation in-kernel).
    w_qkv = _half_split_qkv_weight(params["attn_proj_w"], E, d_kv, d_head
                                   ).astype(jnp.bfloat16)
    w_out = params["out_proj_w"].astype(jnp.bfloat16)
    x_bf16 = x_BTE.astype(jnp.bfloat16)

    qkv = linear(x_bf16.reshape(B * T, E), w_qkv, out_dtype=jnp.bfloat16)
    qkv = qkv.reshape(B, T, E + 2 * d_kv)
    q, k, v = jnp.split(qkv, [E, E + d_kv], axis=-1)

    # TODO(synk): with d_head (or G*d_head) a multiple of 128, keep (B,T,H*D)
    # layout and select heads in the BlockSpec to remove these transposes.
    split_heads = lambda z: z.reshape(B, T, -1, d_head).transpose(0, 2, 1, 3)
    q_BHTD, k_BJTD, v_BJTD = map(split_heads, (q, k, v))

    cos_half = freq_cis_TFC[..., 0].astype(jnp.float32)      # (T, D/2)
    sin_half = freq_cis_TFC[..., 1].astype(jnp.float32)      # (T, D/2)

    # K RoPE once (K is re-used across the GQA group and all Q tiles);
    # Q RoPE + 1/sqrt(D) scale are fused inside the flash kernel.
    k_BJTD = apply_rope(k_BJTD, cos_half, sin_half)

    o_BHTD = gqa_flash_attention(q_BHTD, k_BJTD, v_BJTD,
                                 cos_half * scale, sin_half * scale)

    o_2d = o_BHTD.transpose(0, 2, 1, 3).reshape(B * T, E)
    y = linear(o_2d, w_out, out_dtype=x_BTE.dtype)
    return y.reshape(B, T, E)


# -------------------------------- pure-JAX reference ----------------------------------
def ref_forward(params, x_BTE, freq_cis_TFC, n_heads, n_kv_heads):
    B, T, E = x_BTE.shape
    d_head = E // n_heads
    d_kv = n_kv_heads * d_head

    def apply_rotary(x_BXTD):
        xp = x_BXTD.reshape(*x_BXTD.shape[:-1], -1, 2)
        f = freq_cis_TFC
        out = jnp.stack(
            [xp[..., 0] * f[..., 0] - xp[..., 1] * f[..., 1],
             xp[..., 1] * f[..., 0] + xp[..., 0] * f[..., 1]],
            axis=-1)
        return out.reshape(x_BXTD.shape)

    qkv = x_BTE @ params["attn_proj_w"].T
    q, k, v = jnp.split(qkv, [E, E + d_kv], axis=-1)
    split = lambda z: z.reshape(B, T, -1, d_head).transpose(0, 2, 1, 3)
    q, k, v = map(split, (q, k, v))
    q = apply_rotary(q)
    k = apply_rotary(k)
    G = n_heads // n_kv_heads
    k = jnp.repeat(k, G, axis=1)
    v = jnp.repeat(v, G, axis=1)
    s = jnp.einsum("bhtd,bhsd->bhts", q, k) / jnp.sqrt(jnp.float32(d_head))
    mask = jnp.tril(jnp.ones((T, T), bool))
    s = jnp.where(mask, s, -jnp.inf)
    p = jax.nn.softmax(s, axis=-1)
    o = jnp.einsum("bhts,bhsd->bhtd", p, v)
    y = o.transpose(0, 2, 1, 3).reshape(B, T, E) @ params["out_proj_w"].T
    return y


# ----------------------------------------- main ---------------------------------------
if __name__ == "__main__":
    B, T = 2, 16
    d_embd, n_heads, n_kv_heads = 64, 4, 2
    d_head = d_embd // n_heads
    d_kv_embd = n_kv_heads * d_head

    key = jax.random.PRNGKey(0)
    k_x, k_w1, k_w2 = jax.random.split(key, 3)

    x_BTE = jax.random.normal(k_x, (B, T, d_embd), dtype=jnp.float32)
    params = {
        "attn_proj_w": 0.05 * jax.random.normal(
            k_w1, (d_embd + 2 * d_kv_embd, d_embd), dtype=jnp.float32),
        "out_proj_w": 0.05 * jax.random.normal(
            k_w2, (d_embd, d_embd), dtype=jnp.float32),
    }

    # Standard RoPE frequencies: freq_cis_TFC[t, f] = (cos(t*w_f), sin(t*w_f))
    inv_freq = 1.0 / (10000.0 ** (jnp.arange(0, d_head, 2, dtype=jnp.float32) / d_head))
    angles = jnp.arange(T, dtype=jnp.float32)[:, None] * inv_freq[None, :]   # (T, D/2)
    freq_cis_TFC = jnp.stack([jnp.cos(angles), jnp.sin(angles)], axis=-1)    # (T, D/2, 2)

    fwd = jax.jit(gqa_forward, static_argnames=("n_heads", "n_kv_heads"))
    y = fwd(params, x_BTE, freq_cis_TFC, n_heads=n_heads, n_kv_heads=n_kv_heads)
    y = jax.block_until_ready(y)

    y_ref = ref_forward(params, x_BTE, freq_cis_TFC, n_heads, n_kv_heads)
    assert y.shape == (B, T, d_embd)
    max_err = jnp.max(jnp.abs(y - y_ref))
    # bf16 operands + bf16 intermediate I/O (f32 accumulation) -> loose tolerance.
    assert jnp.allclose(y, y_ref, rtol=4e-2, atol=4e-2), f"max abs err = {max_err}"
    print("KERNEL_OK")
</pallas_src>

<mosaic_0001>
module attributes {stable_mosaic.version = 11 : i64} {
  func.func @_matmul_kernel(%arg0: i32, %arg1: i32, %arg2: i32, %arg3: memref<32x64xbf16, #tpu.memory_space<vmem>>, %arg4: memref<128x64xbf16, #tpu.memory_space<vmem>>, %arg5: memref<32x128xbf16, #tpu.memory_space<vmem>>, %arg6: memref<32x128xf32, #tpu.memory_space<vmem>>) attributes {dimension_semantics = [#tpu.dimension_semantics<parallel>, #tpu.dimension_semantics<parallel>, #tpu.dimension_semantics<arbitrary>], iteration_bounds = array<i64: 1, 1, 1>, scalar_prefetch = 0 : i64, scratch_operands = 1 : i64, tpu.core_type = #tpu.core_type<tc>, window_params = [{transform_indices = @transform_0, window_bounds = array<i64: 32, 64>}, {transform_indices = @transform_1, window_bounds = array<i64: 128, 64>}, {transform_indices = @transform_2, window_bounds = array<i64: 32, 128>}]} {
    %c0_i32 = arith.constant 0 : i32
    %0 = arith.cmpi eq, %arg2, %c0_i32 : i32
    %1 = arith.extui %0 : i1 to i32
    %c0_i32_0 = arith.constant 0 : i32
    %2 = arith.cmpi ne, %1, %c0_i32_0 : i32
    scf.if %2 {
      %cst_10 = arith.constant 0.000000e+00 : f32
      %12 = vector.broadcast %cst_10 : f32 to vector<32x128xf32>
      %c0_11 = arith.constant 0 : index
      %c0_12 = arith.constant 0 : index
      %13 = vector.load %arg6[%c0_11, %c0_12] : memref<32x128xf32, #tpu.memory_space<vmem>>, vector<32x128xf32>
      tpu.vector_store %arg6[%c0_11, %c0_12], %12 {strides = array<i32>} : memref<32x128xf32, #tpu.memory_space<vmem>>, vector<32x128xf32>,
    } else {
    }
    %c0 = arith.constant 0 : index
    %c0_1 = arith.constant 0 : index
    %3 = vector.load %arg6[%c0, %c0_1] : memref<32x128xf32, #tpu.memory_space<vmem>>, vector<32x128xf32>
    %c0_2 = arith.constant 0 : index
    %c0_3 = arith.constant 0 : index
    %4 = vector.load %arg3[%c0_2, %c0_3] : memref<32x64xbf16, #tpu.memory_space<vmem>>, vector<32x64xbf16>
    %c0_4 = arith.constant 0 : index
    %c0_5 = arith.constant 0 : index
    %5 = vector.load %arg4[%c0_4, %c0_5] : memref<128x64xbf16, #tpu.memory_space<vmem>>, vector<128x64xbf16>
    %cst = arith.constant dense<0.000000e+00> : vector<32x128xf32>
    %6 = tpu.matmul %4, %5, %cst {dimension_numbers = #tpu.dot_dimension_numbers<[1], [1], [0], [0], [0, 0, 1, 0], [], []>} : vector<32x64xbf16>, vector<128x64xbf16>, vector<32x128xf32> -> vector<32x128xf32>
    %7 = arith.addf %3, %6 : vector<32x128xf32>
    %c0_6 = arith.constant 0 : index
    %c0_7 = arith.constant 0 : index
    %8 = vector.load %arg6[%c0_6, %c0_7] : memref<32x128xf32, #tpu.memory_space<vmem>>, vector<32x128xf32>
    tpu.vector_store %arg6[%c0_6, %c0_7], %7 {strides = array<i32>} : memref<32x128xf32, #tpu.memory_space<vmem>>, vector<32x128xf32>,
    %c0_i32_8 = arith.constant 0 : i32
    %9 = arith.cmpi eq, %arg2, %c0_i32_8 : i32
    %10 = arith.extui %9 : i1 to i32
    %c0_i32_9 = arith.constant 0 : i32
    %11 = arith.cmpi ne, %10, %c0_i32_9 : i32
    scf.if %11 {
      %c0_10 = arith.constant 0 : index
      %c0_11 = arith.constant 0 : index
      %12 = vector.load %arg6[%c0_10, %c0_11] : memref<32x128xf32, #tpu.memory_space<vmem>>, vector<32x128xf32>
      %13 = arith.truncf %12 : vector<32x128xf32> to vector<32x128xbf16>
      %c0_12 = arith.constant 0 : index
      %c0_13 = arith.constant 0 : index
      %14 = vector.load %arg5[%c0_12, %c0_13] : memref<32x128xbf16, #tpu.memory_space<vmem>>, vector<32x128xbf16>
      tpu.vector_store %arg5[%c0_12, %c0_13], %13 {strides = array<i32>} : memref<32x128xbf16, #tpu.memory_space<vmem>>, vector<32x128xbf16>,
    } else {
    }
    return
  }
  func.func @transform_0(%arg0: i32, %arg1: i32, %arg2: i32) -> (i32, i32) {
    %c0_i32 = arith.constant 0 : i32
    return %arg0, %arg2 : i32, i32
  }
  func.func @transform_1(%arg0: i32, %arg1: i32, %arg2: i32) -> (i32, i32) {
    %c0_i32 = arith.constant 0 : i32
    return %arg1, %arg2 : i32, i32
  }
  func.func @transform_2(%arg0: i32, %arg1: i32, %arg2: i32) -> (i32, i32) {
    %c0_i32 = arith.constant 0 : i32
    return %arg0, %arg1 : i32, i32
  }
}

module attributes {stable_mosaic.version = 11 : i64} {
  func.func @_rope_kernel(%arg0: i32, %arg1: i32, %arg2: memref<1x2x16x16xbf16, #tpu.memory_space<vmem>>, %arg3: memref<16x8xf32, #tpu.memory_space<vmem>>, %arg4: memref<16x8xf32, #tpu.memory_space<vmem>>, %arg5: memref<1x2x16x16xbf16, #tpu.memory_space<vmem>>) attributes {dimension_semantics = [#tpu.dimension_semantics<parallel>, #tpu.dimension_semantics<parallel>], iteration_bounds = array<i64: 2, 1>, scalar_prefetch = 0 : i64, scratch_operands = 0 : i64, tpu.core_type = #tpu.core_type<tc>, window_params = [{transform_indices = @transform_0, window_bounds = array<i64: 1, 2, 16, 16>}, {transform_indices = @transform_1, window_bounds = array<i64: 16, 8>}, {transform_indices = @transform_2, window_bounds = array<i64: 16, 8>}, {transform_indices = @transform_3, window_bounds = array<i64: 1, 2, 16, 16>}]} {
    %c0 = arith.constant 0 : index
    %c0_0 = arith.constant 0 : index
    %c0_1 = arith.constant 0 : index
    %c0_2 = arith.constant 0 : index
    %0 = vector.load %arg2[%c0, %c0_0, %c0_1, %c0_2] : memref<1x2x16x16xbf16, #tpu.memory_space<vmem>>, vector<1x2x16x16xbf16>
    %1 = vector.shape_cast %0 : vector<1x2x16x16xbf16> to vector<2x16x16xbf16>
    %2 = arith.extf %1 : vector<2x16x16xbf16> to vector<2x16x16xf32>
    %3 = vector.extract_strided_slice %2 {offsets = [0, 0, 0], sizes = [2, 16, 8], strides = [1, 1, 1]} : vector<2x16x16xf32> to vector<2x16x8xf32>
    %4 = vector.extract_strided_slice %2 {offsets = [0, 0, 8], sizes = [2, 16, 8], strides = [1, 1, 1]} : vector<2x16x16xf32> to vector<2x16x8xf32>
    %c0_3 = arith.constant 0 : index
    %c0_4 = arith.constant 0 : index
    %5 = vector.load %arg3[%c0_3, %c0_4] : memref<16x8xf32, #tpu.memory_space<vmem>>, vector<16x8xf32>
    %c0_5 = arith.constant 0 : index
    %c0_6 = arith.constant 0 : index
    %6 = vector.load %arg4[%c0_5, %c0_6] : memref<16x8xf32, #tpu.memory_space<vmem>>, vector<16x8xf32>
    %7 = vector.shape_cast %5 : vector<16x8xf32> to vector<1x16x8xf32>
    %8 = vector.broadcast %7 : vector<1x16x8xf32> to vector<2x16x8xf32>
    %9 = arith.mulf %3, %8 : vector<2x16x8xf32>
    %10 = vector.shape_cast %6 : vector<16x8xf32> to vector<1x16x8xf32>
    %11 = vector.broadcast %10 : vector<1x16x8xf32> to vector<2x16x8xf32>
    %12 = arith.mulf %4, %11 : vector<2x16x8xf32>
    %13 = arith.subf %9, %12 : vector<2x16x8xf32>
    %14 = vector.shape_cast %5 : vector<16x8xf32> to vector<1x16x8xf32>
    %15 = vector.broadcast %14 : vector<1x16x8xf32> to vector<2x16x8xf32>
    %16 = arith.mulf %4, %15 : vector<2x16x8xf32>
    %17 = vector.shape_cast %6 : vector<16x8xf32> to vector<1x16x8xf32>
    %18 = vector.broadcast %17 : vector<1x16x8xf32> to vector<2x16x8xf32>
    %19 = arith.mulf %3, %18 : vector<2x16x8xf32>
    %20 = arith.addf %16, %19 : vector<2x16x8xf32>
    %21 = tpu.concatenate %13, %20 in 2 : vector<2x16x8xf32>, vector<2x16x8xf32> -> vector<2x16x16xf32>
    %22 = arith.truncf %21 : vector<2x16x16xf32> to vector<2x16x16xbf16>
    %c0_7 = arith.constant 0 : index
    %c0_8 = arith.constant 0 : index
    %c0_9 = arith.constant 0 : index
    %c0_10 = arith.constant 0 : index
    %23 = vector.load %arg5[%c0_7, %c0_8, %c0_9, %c0_10] : memref<1x2x16x16xbf16, #tpu.memory_space<vmem>>, vector<1x2x16x16xbf16>
    %24 = vector.shape_cast %23 : vector<1x2x16x16xbf16> to vector<2x16x16xbf16>
    %25 = vector.shape_cast %22 : vector<2x16x16xbf16> to vector<1x2x16x16xbf16>
    tpu.vector_store %arg5[%c0_7, %c0_8, %c0_9, %c0_10], %25 {strides = array<i32>} : memref<1x2x16x16xbf16, #tpu.memory_space<vmem>>, vector<1x2x16x16xbf16>,
    return
  }
  func.func @transform_0(%arg0: i32, %arg1: i32) -> (i32, i32, i32, i32) {
    %c0_i32 = arith.constant 0 : i32
    %c0_i32_0 = arith.constant 0 : i32
    %c0_i32_1 = arith.constant 0 : i32
    return %arg0, %c0_i32, %arg1, %c0_i32_0 : i32, i32, i32, i32
  }
  func.func @transform_1(%arg0: i32, %arg1: i32) -> (i32, i32) {
    %c0_i32 = arith.constant 0 : i32
    %c0_i32_0 = arith.constant 0 : i32
    return %arg1, %c0_i32 : i32, i32
  }
  func.func @transform_2(%arg0: i32, %arg1: i32) -> (i32, i32) {
    %c0_i32 = arith.constant 0 : i32
    %c0_i32_0 = arith.constant 0 : i32
    return %arg1, %c0_i32 : i32, i32
  }
  func.func @transform_3(%arg0: i32, %arg1: i32) -> (i32, i32, i32, i32) {
    %c0_i32 = arith.constant 0 : i32
    %c0_i32_0 = arith.constant 0 : i32
    %c0_i32_1 = arith.constant 0 : i32
    return %arg0, %c0_i32, %arg1, %c0_i32_0 : i32, i32, i32, i32
  }
}

module attributes {stable_mosaic.version = 11 : i64} {
  func.func @_flash_kernel(%arg0: i32, %arg1: i32, %arg2: i32, %arg3: i32, %arg4: memref<1x2x16x16xbf16, #tpu.memory_space<vmem>>, %arg5: memref<1x1x16x16xbf16, #tpu.memory_space<vmem>>, %arg6: memref<1x1x16x16xbf16, #tpu.memory_space<vmem>>, %arg7: memref<16x8xf32, #tpu.memory_space<vmem>>, %arg8: memref<16x8xf32, #tpu.memory_space<vmem>>, %arg9: memref<1x2x16x16xbf16, #tpu.memory_space<vmem>>, %arg10: memref<32x1xf32, #tpu.memory_space<vmem>>, %arg11: memref<32x1xf32, #tpu.memory_space<vmem>>, %arg12: memref<32x16xf32, #tpu.memory_space<vmem>>, %arg13: memref<32x16xbf16, #tpu.memory_space<vmem>>) attributes {dimension_semantics = [#tpu.dimension_semantics<parallel>, #tpu.dimension_semantics<parallel>, #tpu.dimension_semantics<parallel>, #tpu.dimension_semantics<arbitrary>], iteration_bounds = array<i64: 2, 2, 1, 1>, scalar_prefetch = 0 : i64, scratch_operands = 4 : i64, tpu.core_type = #tpu.core_type<tc>, window_params = [{transform_indices = @transform_0, window_bounds = array<i64: 1, 2, 16, 16>}, {transform_indices = @transform_1, window_bounds = array<i64: 1, 1, 16, 16>}, {transform_indices = @transform_2, window_bounds = array<i64: 1, 1, 16, 16>}, {transform_indices = @transform_3, window_bounds = array<i64: 16, 8>}, {transform_indices = @transform_4, window_bounds = array<i64: 16, 8>}, {transform_indices = @transform_5, window_bounds = array<i64: 1, 2, 16, 16>}]} {
    %c0_i32 = arith.constant 0 : i32
    %0 = arith.cmpi eq, %arg3, %c0_i32 : i32
    %1 = arith.extui %0 : i1 to i32
    %c0_i32_0 = arith.constant 0 : i32
    %2 = arith.cmpi ne, %1, %c0_i32_0 : i32
    scf.if %2 {
      %c0 = arith.constant 0 : index
      %c0_5 = arith.constant 0 : index
      %c0_6 = arith.constant 0 : index
      %c0_7 = arith.constant 0 : index
      %12 = vector.load %arg4[%c0, %c0_5, %c0_6, %c0_7] : memref<1x2x16x16xbf16, #tpu.memory_space<vmem>>, vector<1x2x16x16xbf16>
      %13 = vector.shape_cast %12 : vector<1x2x16x16xbf16> to vector<2x16x16xbf16>
      %14 = arith.extf %13 : vector<2x16x16xbf16> to vector<2x16x16xf32>
      %c0_8 = arith.constant 0 : index
      %c0_9 = arith.constant 0 : index
      %15 = vector.load %arg7[%c0_8, %c0_9] : memref<16x8xf32, #tpu.memory_space<vmem>>, vector<16x8xf32>
      %c0_10 = arith.constant 0 : index
      %c0_11 = arith.constant 0 : index
      %16 = vector.load %arg8[%c0_10, %c0_11] : memref<16x8xf32, #tpu.memory_space<vmem>>, vector<16x8xf32>
      %17 = vector.extract_strided_slice %14 {offsets = [0, 0, 0], sizes = [2, 16, 8], strides = [1, 1, 1]} : vector<2x16x16xf32> to vector<2x16x8xf32>
      %18 = vector.extract_strided_slice %14 {offsets = [0, 0, 8], sizes = [2, 16, 8], strides = [1, 1, 1]} : vector<2x16x16xf32> to vector<2x16x8xf32>
      %19 = vector.shape_cast %15 : vector<16x8xf32> to vector<1x16x8xf32>
      %20 = vector.broadcast %19 : vector<1x16x8xf32> to vector<2x16x8xf32>
      %21 = arith.mulf %17, %20 : vector<2x16x8xf32>
      %22 = vector.shape_cast %16 : vector<16x8xf32> to vector<1x16x8xf32>
      %23 = vector.broadcast %22 : vector<1x16x8xf32> to vector<2x16x8xf32>
      %24 = arith.mulf %18, %23 : vector<2x16x8xf32>
      %25 = arith.subf %21, %24 : vector<2x16x8xf32>
      %26 = vector.shape_cast %15 : vector<16x8xf32> to vector<1x16x8xf32>
      %27 = vector.broadcast %26 : vector<1x16x8xf32> to vector<2x16x8xf32>
      %28 = arith.mulf %18, %27 : vector<2x16x8xf32>
      %29 = vector.shape_cast %16 : vector<16x8xf32> to vector<1x16x8xf32>
      %30 = vector.broadcast %29 : vector<1x16x8xf32> to vector<2x16x8xf32>
      %31 = arith.mulf %17, %30 : vector<2x16x8xf32>
      %32 = arith.addf %28, %31 : vector<2x16x8xf32>
      %33 = tpu.concatenate %25, %32 in 2 : vector<2x16x8xf32>, vector<2x16x8xf32> -> vector<2x16x16xf32>
      %34 = vector.shape_cast %33 : vector<2x16x16xf32> to vector<32x16xf32>
      %35 = arith.truncf %34 : vector<32x16xf32> to vector<32x16xbf16>
      %c0_12 = arith.constant 0 : index
      %c0_13 = arith.constant 0 : index
      %36 = vector.load %arg13[%c0_12, %c0_13] : memref<32x16xbf16, #tpu.memory_space<vmem>>, vector<32x16xbf16>
      tpu.vector_store %arg13[%c0_12, %c0_13], %35 {strides = array<i32>} : memref<32x16xbf16, #tpu.memory_space<vmem>>, vector<32x16xbf16>,
      %cst = arith.constant -1.000000e+30 : f32
      %37 = vector.broadcast %cst : f32 to vector<32x1xf32>
      %c0_14 = arith.constant 0 : index
      %c0_15 = arith.constant 0 : index
      %38 = vector.load %arg10[%c0_14, %c0_15] : memref<32x1xf32, #tpu.memory_space<vmem>>, vector<32x1xf32>
      tpu.vector_store %arg10[%c0_14, %c0_15], %37 {strides = array<i32>} : memref<32x1xf32, #tpu.memory_space<vmem>>, vector<32x1xf32>,
      %cst_16 = arith.constant 0.000000e+00 : f32
      %39 = vector.broadcast %cst_16 : f32 to vector<32x1xf32>
      %c0_17 = arith.constant 0 : index
      %c0_18 = arith.constant 0 : index
      %40 = vector.load %arg11[%c0_17, %c0_18] : memref<32x1xf32, #tpu.memory_space<vmem>>, vector<32x1xf32>
      tpu.vector_store %arg11[%c0_17, %c0_18], %39 {strides = array<i32>} : memref<32x1xf32, #tpu.memory_space<vmem>>, vector<32x1xf32>,
      %cst_19 = arith.constant 0.000000e+00 : f32
      %41 = vector.broadcast %cst_19 : f32 to vector<32x16xf32>
      %c0_20 = arith.constant 0 : index
      %c0_21 = arith.constant 0 : index
      %42 = vector.load %arg12[%c0_20, %c0_21] : memref<32x16xf32, #tpu.memory_space<vmem>>, vector<32x16xf32>
      tpu.vector_store %arg12[%c0_20, %c0_21], %41 {strides = array<i32>} : memref<32x16xf32, #tpu.memory_space<vmem>>, vector<32x16xf32>,
    } else {
    }
    %3 = arith.cmpi slt, %arg3, %arg2 : i32
    %4 = arith.extui %3 : i1 to i32
    %c0_i32_1 = arith.constant 0 : i32
    %5 = arith.cmpi ne, %4, %c0_i32_1 : i32
    scf.if %5 {
      %c0 = arith.constant 0 : index
      %c0_5 = arith.constant 0 : index
      %12 = vector.load %arg13[%c0, %c0_5] : memref<32x16xbf16, #tpu.memory_space<vmem>>, vector<32x16xbf16>
      %c0_6 = arith.constant 0 : index
      %c0_7 = arith.constant 0 : index
      %c0_8 = arith.constant 0 : index
      %c0_9 = arith.constant 0 : index
      %13 = vector.load %arg5[%c0_6, %c0_7, %c0_8, %c0_9] : memref<1x1x16x16xbf16, #tpu.memory_space<vmem>>, vector<1x1x16x16xbf16>
      %14 = vector.shape_cast %13 : vector<1x1x16x16xbf16> to vector<16x16xbf16>
      %c0_10 = arith.constant 0 : index
      %c0_11 = arith.constant 0 : index
      %c0_12 = arith.constant 0 : index
      %c0_13 = arith.constant 0 : index
      %15 = vector.load %arg6[%c0_10, %c0_11, %c0_12, %c0_13] : memref<1x1x16x16xbf16, #tpu.memory_space<vmem>>, vector<1x1x16x16xbf16>
      %16 = vector.shape_cast %15 : vector<1x1x16x16xbf16> to vector<16x16xbf16>
      %cst = arith.constant dense<0.000000e+00> : vector<32x16xf32>
      %17 = tpu.matmul %12, %14, %cst {dimension_numbers = #tpu.dot_dimension_numbers<[1], [1], [0], [0], [0, 0, 1, 0], [], []>} : vector<32x16xbf16>, vector<16x16xbf16>, vector<32x16xf32> -> vector<32x16xf32>
      %c0_14 = arith.constant 0 : index
      %c0_15 = arith.constant 0 : index
      %18 = vector.load %arg10[%c0_14, %c0_15] : memref<32x1xf32, #tpu.memory_space<vmem>>, vector<32x1xf32>
      %cst_16 = arith.constant dense<0xFF800000> : vector<32xf32>
      %19 = vector.multi_reduction <maximumf>, %17, %cst_16 [1] : vector<32x16xf32> to vector<32xf32>
      %20 = vector.shape_cast %19 : vector<32xf32> to vector<32x1xf32>
      %21 = arith.maximumf %18, %20 : vector<32x1xf32>
      %22 = arith.subf %18, %21 : vector<32x1xf32>
      %23 = math.exp %22 : vector<32x1xf32>
      %24 = vector.broadcast %21 : vector<32x1xf32> to vector<32x16xf32>
      %25 = arith.subf %17, %24 : vector<32x16xf32>
      %26 = math.exp %25 : vector<32x16xf32>
      %c0_17 = arith.constant 0 : index
      %c0_18 = arith.constant 0 : index
      %27 = vector.load %arg11[%c0_17, %c0_18] : memref<32x1xf32, #tpu.memory_space<vmem>>, vector<32x1xf32>
      %28 = arith.mulf %23, %27 : vector<32x1xf32>
      %cst_19 = arith.constant dense<0.000000e+00> : vector<32xf32>
      %29 = vector.multi_reduction <add>, %26, %cst_19 [1] : vector<32x16xf32> to vector<32xf32>
      %30 = vector.shape_cast %29 : vector<32xf32> to vector<32x1xf32>
      %31 = arith.addf %28, %30 : vector<32x1xf32>
      %c0_20 = arith.constant 0 : index
      %c0_21 = arith.constant 0 : index
      %32 = vector.load %arg11[%c0_20, %c0_21] : memref<32x1xf32, #tpu.memory_space<vmem>>, vector<32x1xf32>
      tpu.vector_store %arg11[%c0_20, %c0_21], %31 {strides = array<i32>} : memref<32x1xf32, #tpu.memory_space<vmem>>, vector<32x1xf32>,
      %c0_22 = arith.constant 0 : index
      %c0_23 = arith.constant 0 : index
      %33 = vector.load %arg12[%c0_22, %c0_23] : memref<32x16xf32, #tpu.memory_space<vmem>>, vector<32x16xf32>
      %34 = vector.broadcast %23 : vector<32x1xf32> to vector<32x16xf32>
      %35 = arith.mulf %34, %33 : vector<32x16xf32>
      %36 = arith.truncf %26 : vector<32x16xf32> to vector<32x16xbf16>
      %cst_24 = arith.constant dense<0.000000e+00> : vector<32x16xf32>
      %37 = tpu.matmul %36, %16, %cst_24 {dimension_numbers = #tpu.dot_dimension_numbers<[1], [0], [0], [1], [0, 0, 1, 1], [], []>} : vector<32x16xbf16>, vector<16x16xbf16>, vector<32x16xf32> -> vector<32x16xf32>
      %38 = arith.addf %35, %37 : vector<32x16xf32>
      %c0_25 = arith.constant 0 : index
      %c0_26 = arith.constant 0 : index
      %39 = vector.load %arg12[%c0_25, %c0_26] : memref<32x16xf32, #tpu.memory_space<vmem>>, vector<32x16xf32>
      tpu.vector_store %arg12[%c0_25, %c0_26], %38 {strides = array<i32>} : memref<32x16xf32, #tpu.memory_space<vmem>>, vector<32x16xf32>,
      %c0_27 = arith.constant 0 : index
      %c0_28 = arith.constant 0 : index
      %40 = vector.load %arg10[%c0_27, %c0_28] : memref<32x1xf32, #tpu.memory_space<vmem>>, vector<32x1xf32>
      tpu.vector_store %arg10[%c0_27, %c0_28], %21 {strides = array<i32>} : memref<32x1xf32, #tpu.memory_space<vmem>>, vector<32x1xf32>,
    } else {
    }
    %6 = arith.cmpi eq, %arg3, %arg2 : i32
    %7 = arith.extui %6 : i1 to i32
    %c0_i32_2 = arith.constant 0 : i32
    %8 = arith.cmpi ne, %7, %c0_i32_2 : i32
    scf.if %8 {
      %c0 = arith.constant 0 : index
      %c0_5 = arith.constant 0 : index
      %12 = vector.load %arg13[%c0, %c0_5] : memref<32x16xbf16, #tpu.memory_space<vmem>>, vector<32x16xbf16>
      %c0_6 = arith.constant 0 : index
      %c0_7 = arith.constant 0 : index
      %c0_8 = arith.constant 0 : index
      %c0_9 = arith.constant 0 : index
      %13 = vector.load %arg5[%c0_6, %c0_7, %c0_8, %c0_9] : memref<1x1x16x16xbf16, #tpu.memory_space<vmem>>, vector<1x1x16x16xbf16>
      %14 = vector.shape_cast %13 : vector<1x1x16x16xbf16> to vector<16x16xbf16>
      %c0_10 = arith.constant 0 : index
      %c0_11 = arith.constant 0 : index
      %c0_12 = arith.constant 0 : index
      %c0_13 = arith.constant 0 : index
      %15 = vector.load %arg6[%c0_10, %c0_11, %c0_12, %c0_13] : memref<1x1x16x16xbf16, #tpu.memory_space<vmem>>, vector<1x1x16x16xbf16>
      %16 = vector.shape_cast %15 : vector<1x1x16x16xbf16> to vector<16x16xbf16>
      %cst = arith.constant dense<0.000000e+00> : vector<32x16xf32>
      %17 = tpu.matmul %12, %14, %cst {dimension_numbers = #tpu.dot_dimension_numbers<[1], [1], [0], [0], [0, 0, 1, 0], [], []>} : vector<32x16xbf16>, vector<16x16xbf16>, vector<32x16xf32> -> vector<32x16xf32>
      %18 = tpu.iota {dimensions = array<i32: 0>} : vector<32x16xi32>
      %c16_i32 = arith.constant 16 : i32
      %19 = arith.muli %arg2, %c16_i32 : i32
      %c16_i32_14 = arith.constant 16 : i32
      %c0_i32_15 = arith.constant 0 : i32
      %20 = arith.cmpi eq, %c16_i32_14, %c0_i32_15 : i32
      %c1_i32 = arith.constant 1 : i32
      %21 = arith.select %20, %c1_i32, %c16_i32_14 : i32
      %22 = vector.broadcast %21 : i32 to vector<32x16xi32>
      %23 = arith.remsi %18, %22 : vector<32x16xi32>
      %c0_i32_16 = arith.constant 0 : i32
      %24 = vector.broadcast %c0_i32_16 : i32 to vector<32x16xi32>
      %25 = arith.cmpi ne, %23, %24 : vector<32x16xi32>
      %c0_i32_17 = arith.constant 0 : i32
      %26 = vector.broadcast %c0_i32_17 : i32 to vector<32x16xi32>
      %27 = arith.cmpi slt, %23, %26 : vector<32x16xi32>
      %c0_i32_18 = arith.constant 0 : i32
      %28 = arith.cmpi slt, %21, %c0_i32_18 : i32
      %29 = vector.broadcast %28 : i1 to vector<32x16xi1>
      %30 = vector.broadcast %29 : vector<32x16xi1> to vector<32x16xi1>
      %31 = arith.xori %27, %30 : vector<32x16xi1>
      %32 = arith.andi %31, %25 : vector<32x16xi1>
      %33 = vector.broadcast %21 : i32 to vector<32x16xi32>
      %34 = arith.addi %23, %33 : vector<32x16xi32>
      %35 = arith.select %32, %34, %23 : vector<32x16xi1>, vector<32x16xi32>
      %36 = vector.broadcast %19 : i32 to vector<32x16xi32>
      %37 = arith.addi %36, %35 : vector<32x16xi32>
      %c16_i32_19 = arith.constant 16 : i32
      %38 = arith.muli %arg3, %c16_i32_19 : i32
      %39 = tpu.iota {dimensions = array<i32: 1>} : vector<32x16xi32>
      %40 = vector.broadcast %38 : i32 to vector<32x16xi32>
      %41 = arith.addi %40, %39 : vector<32x16xi32>
      %42 = arith.cmpi sge, %37, %41 : vector<32x16xi32>
      %cst_20 = arith.constant -1.000000e+30 : f32
      %43 = vector.broadcast %cst_20 : f32 to vector<32x16xf32>
      %44 = arith.select %42, %17, %43 : vector<32x16xi1>, vector<32x16xf32>
      %c0_21 = arith.constant 0 : index
      %c0_22 = arith.constant 0 : index
      %45 = vector.load %arg10[%c0_21, %c0_22] : memref<32x1xf32, #tpu.memory_space<vmem>>, vector<32x1xf32>
      %cst_23 = arith.constant dense<0xFF800000> : vector<32xf32>
      %46 = vector.multi_reduction <maximumf>, %44, %cst_23 [1] : vector<32x16xf32> to vector<32xf32>
      %47 = vector.shape_cast %46 : vector<32xf32> to vector<32x1xf32>
      %48 = arith.maximumf %45, %47 : vector<32x1xf32>
      %49 = arith.subf %45, %48 : vector<32x1xf32>
      %50 = math.exp %49 : vector<32x1xf32>
      %51 = vector.broadcast %48 : vector<32x1xf32> to vector<32x16xf32>
      %52 = arith.subf %44, %51 : vector<32x16xf32>
      %53 = math.exp %52 : vector<32x16xf32>
      %c0_24 = arith.constant 0 : index
      %c0_25 = arith.constant 0 : index
      %54 = vector.load %arg11[%c0_24, %c0_25] : memref<32x1xf32, #tpu.memory_space<vmem>>, vector<32x1xf32>
      %55 = arith.mulf %50, %54 : vector<32x1xf32>
      %cst_26 = arith.constant dense<0.000000e+00> : vector<32xf32>
      %56 = vector.multi_reduction <add>, %53, %cst_26 [1] : vector<32x16xf32> to vector<32xf32>
      %57 = vector.shape_cast %56 : vector<32xf32> to vector<32x1xf32>
      %58 = arith.addf %55, %57 : vector<32x1xf32>
      %c0_27 = arith.constant 0 : index
      %c0_28 = arith.constant 0 : index
      %59 = vector.load %arg11[%c0_27, %c0_28] : memref<32x1xf32, #tpu.memory_space<vmem>>, vector<32x1xf32>
      tpu.vector_store %arg11[%c0_27, %c0_28], %58 {strides = array<i32>} : memref<32x1xf32, #tpu.memory_space<vmem>>, vector<32x1xf32>,
      %c0_29 = arith.constant 0 : index
      %c0_30 = arith.constant 0 : index
      %60 = vector.load %arg12[%c0_29, %c0_30] : memref<32x16xf32, #tpu.memory_space<vmem>>, vector<32x16xf32>
      %61 = vector.broadcast %50 : vector<32x1xf32> to vector<32x16xf32>
      %62 = arith.mulf %61, %60 : vector<32x16xf32>
      %63 = arith.truncf %53 : vector<32x16xf32> to vector<32x16xbf16>
      %cst_31 = arith.constant dense<0.000000e+00> : vector<32x16xf32>
      %64 = tpu.matmul %63, %16, %cst_31 {dimension_numbers = #tpu.dot_dimension_numbers<[1], [0], [0], [1], [0, 0, 1, 1], [], []>} : vector<32x16xbf16>, vector<16x16xbf16>, vector<32x16xf32> -> vector<32x16xf32>
      %65 = arith.addf %62, %64 : vector<32x16xf32>
      %c0_32 = arith.constant 0 : index
      %c0_33 = arith.constant 0 : index
      %66 = vector.load %arg12[%c0_32, %c0_33] : memref<32x16xf32, #tpu.memory_space<vmem>>, vector<32x16xf32>
      tpu.vector_store %arg12[%c0_32, %c0_33], %65 {strides = array<i32>} : memref<32x16xf32, #tpu.memory_space<vmem>>, vector<32x16xf32>,
      %c0_34 = arith.constant 0 : index
      %c0_35 = arith.constant 0 : index
      %67 = vector.load %arg10[%c0_34, %c0_35] : memref<32x1xf32, #tpu.memory_space<vmem>>, vector<32x1xf32>
      tpu.vector_store %arg10[%c0_34, %c0_35], %48 {strides = array<i32>} : memref<32x1xf32, #tpu.memory_space<vmem>>, vector<32x1xf32>,
    } else {
    }
    %c0_i32_3 = arith.constant 0 : i32
    %9 = arith.cmpi eq, %arg3, %c0_i32_3 : i32
    %10 = arith.extui %9 : i1 to i32
    %c0_i32_4 = arith.constant 0 : i32
    %11 = arith.cmpi ne, %10, %c0_i32_4 : i32
    scf.if %11 {
      %c0 = arith.constant 0 : index
      %c0_5 = arith.constant 0 : index
      %12 = vector.load %arg11[%c0, %c0_5] : memref<32x1xf32, #tpu.memory_space<vmem>>, vector<32x1xf32>
      %13 = tpu.reciprocal %12 {approx = true} : vector<32x1xf32> -> vector<32x1xf32>
      %c0_6 = arith.constant 0 : index
      %c0_7 = arith.constant 0 : index
      %14 = vector.load %arg12[%c0_6, %c0_7] : memref<32x16xf32, #tpu.memory_space<vmem>>, vector<32x16xf32>
      %15 = vector.broadcast %13 : vector<32x1xf32> to vector<32x16xf32>
      %16 = arith.mulf %14, %15 : vector<32x16xf32>
      %17 = vector.shape_cast %16 : vector<32x16xf32> to vector<2x16x16xf32>
      %18 = arith.truncf %17 : vector<2x16x16xf32> to vector<2x16x16xbf16>
      %c0_8 = arith.constant 0 : index
      %c0_9 = arith.constant 0 : index
      %c0_10 = arith.constant 0 : index
      %c0_11 = arith.constant 0 : index
      %19 = vector.load %arg9[%c0_8, %c0_9, %c0_10, %c0_11] : memref<1x2x16x16xbf16, #tpu.memory_space<vmem>>, vector<1x2x16x16xbf16>
      %20 = vector.shape_cast %19 : vector<1x2x16x16xbf16> to vector<2x16x16xbf16>
      %21 = vector.shape_cast %18 : vector<2x16x16xbf16> to vector<1x2x16x16xbf16>
      tpu.vector_store %arg9[%c0_8, %c0_9, %c0_10, %c0_11], %21 {strides = array<i32>} : memref<1x2x16x16xbf16, #tpu.memory_space<vmem>>, vector<1x2x16x16xbf16>,
    } else {
    }
    return
  }
  func.func @transform_0(%arg0: i32, %arg1: i32, %arg2: i32, %arg3: i32) -> (i32, i32, i32, i32) {
    %c0_i32 = arith.constant 0 : i32
    %c0_i32_0 = arith.constant 0 : i32
    return %arg0, %arg1, %arg2, %c0_i32 : i32, i32, i32, i32
  }
  func.func @transform_1(%arg0: i32, %arg1: i32, %arg2: i32, %arg3: i32) -> (i32, i32, i32, i32) {
    %0 = arith.minsi %arg3, %arg2 : i32
    %c0_i32 = arith.constant 0 : i32
    %c0_i32_0 = arith.constant 0 : i32
    return %arg0, %arg1, %0, %c0_i32 : i32, i32, i32, i32
  }
  func.func @transform_2(%arg0: i32, %arg1: i32, %arg2: i32, %arg3: i32) -> (i32, i32, i32, i32) {
    %0 = arith.minsi %arg3, %arg2 : i32
    %c0_i32 = arith.constant 0 : i32
    %c0_i32_0 = arith.constant 0 : i32
    return %arg0, %arg1, %0, %c0_i32 : i32, i32, i32, i32
  }
  func.func @transform_3(%arg0: i32, %arg1: i32, %arg2: i32, %arg3: i32) -> (i32, i32) {
    %c0_i32 = arith.constant 0 : i32
    %c0_i32_0 = arith.constant 0 : i32
    return %arg2, %c0_i32 : i32, i32
  }
  func.func @transform_4(%arg0: i32, %arg1: i32, %arg2: i32, %arg3: i32) -> (i32, i32) {
    %c0_i32 = arith.constant 0 : i32
    %c0_i32_0 = arith.constant 0 : i32
    return %arg2, %c0_i32 : i32, i32
  }
  func.func @transform_5(%arg0: i32, %arg1: i32, %arg2: i32, %arg3: i32) -> (i32, i32, i32, i32) {
    %c0_i32 = arith.constant 0 : i32
    %c0_i32_0 = arith.constant 0 : i32
    return %arg0, %arg1, %arg2, %c0_i32 : i32, i32, i32, i32
  }
}

module attributes {stable_mosaic.version = 11 : i64} {
  func.func @_matmul_kernel(%arg0: i32, %arg1: i32, %arg2: i32, %arg3: memref<32x64xbf16, #tpu.memory_space<vmem>>, %arg4: memref<64x64xbf16, #tpu.memory_space<vmem>>, %arg5: memref<32x64xf32, #tpu.memory_space<vmem>>, %arg6: memref<32x64xf32, #tpu.memory_space<vmem>>) attributes {dimension_semantics = [#tpu.dimension_semantics<parallel>, #tpu.dimension_semantics<parallel>, #tpu.dimension_semantics<arbitrary>], iteration_bounds = array<i64: 1, 1, 1>, scalar_prefetch = 0 : i64, scratch_operands = 1 : i64, tpu.core_type = #tpu.core_type<tc>, window_params = [{transform_indices = @transform_0, window_bounds = array<i64: 32, 64>}, {transform_indices = @transform_1, window_bounds = array<i64: 64, 64>}, {transform_indices = @transform_2, window_bounds = array<i64: 32, 64>}]} {
    %c0_i32 = arith.constant 0 : i32
    %0 = arith.cmpi eq, %arg2, %c0_i32 : i32
    %1 = arith.extui %0 : i1 to i32
    %c0_i32_0 = arith.constant 0 : i32
    %2 = arith.cmpi ne, %1, %c0_i32_0 : i32
    scf.if %2 {
      %cst_10 = arith.constant 0.000000e+00 : f32
      %12 = vector.broadcast %cst_10 : f32 to vector<32x64xf32>
      %c0_11 = arith.constant 0 : index
      %c0_12 = arith.constant 0 : index
      %13 = vector.load %arg6[%c0_11, %c0_12] : memref<32x64xf32, #tpu.memory_space<vmem>>, vector<32x64xf32>
      tpu.vector_store %arg6[%c0_11, %c0_12], %12 {strides = array<i32>} : memref<32x64xf32, #tpu.memory_space<vmem>>, vector<32x64xf32>,
    } else {
    }
    %c0 = arith.constant 0 : index
    %c0_1 = arith.constant 0 : index
    %3 = vector.load %arg6[%c0, %c0_1] : memref<32x64xf32, #tpu.memory_space<vmem>>, vector<32x64xf32>
    %c0_2 = arith.constant 0 : index
    %c0_3 = arith.constant 0 : index
    %4 = vector.load %arg3[%c0_2, %c0_3] : memref<32x64xbf16, #tpu.memory_space<vmem>>, vector<32x64xbf16>
    %c0_4 = arith.constant 0 : index
    %c0_5 = arith.constant 0 : index
    %5 = vector.load %arg4[%c0_4, %c0_5] : memref<64x64xbf16, #tpu.memory_space<vmem>>, vector<64x64xbf16>
    %cst = arith.constant dense<0.000000e+00> : vector<32x64xf32>
    %6 = tpu.matmul %4, %5, %cst {dimension_numbers = #tpu.dot_dimension_numbers<[1], [1], [0], [0], [0, 0, 1, 0], [], []>} : vector<32x64xbf16>, vector<64x64xbf16>, vector<32x64xf32> -> vector<32x64xf32>
    %7 = arith.addf %3, %6 : vector<32x64xf32>
    %c0_6 = arith.constant 0 : index
    %c0_7 = arith.constant 0 : index
    %8 = vector.load %arg6[%c0_6, %c0_7] : memref<32x64xf32, #tpu.memory_space<vmem>>, vector<32x64xf32>
    tpu.vector_store %arg6[%c0_6, %c0_7], %7 {strides = array<i32>} : memref<32x64xf32, #tpu.memory_space<vmem>>, vector<32x64xf32>,
    %c0_i32_8 = arith.constant 0 : i32
    %9 = arith.cmpi eq, %arg2, %c0_i32_8 : i32
    %10 = arith.extui %9 : i1 to i32
    %c0_i32_9 = arith.constant 0 : i32
    %11 = arith.cmpi ne, %10, %c0_i32_9 : i32
    scf.if %11 {
      %c0_10 = arith.constant 0 : index
      %c0_11 = arith.constant 0 : index
      %12 = vector.load %arg6[%c0_10, %c0_11] : memref<32x64xf32, #tpu.memory_space<vmem>>, vector<32x64xf32>
      %c0_12 = arith.constant 0 : index
      %c0_13 = arith.constant 0 : index
      %13 = vector.load %arg5[%c0_12, %c0_13] : memref<32x64xf32, #tpu.memory_space<vmem>>, vector<32x64xf32>
      tpu.vector_store %arg5[%c0_12, %c0_13], %12 {strides = array<i32>} : memref<32x64xf32, #tpu.memory_space<vmem>>, vector<32x64xf32>,
    } else {
    }
    return
  }
  func.func @transform_0(%arg0: i32, %arg1: i32, %arg2: i32) -> (i32, i32) {
    %c0_i32 = arith.constant 0 : i32
    return %arg0, %arg2 : i32, i32
  }
  func.func @transform_1(%arg0: i32, %arg1: i32, %arg2: i32) -> (i32, i32) {
    %c0_i32 = arith.constant 0 : i32
    return %arg1, %arg2 : i32, i32
  }
  func.func @transform_2(%arg0: i32, %arg1: i32, %arg2: i32) -> (i32, i32) {
    %c0_i32 = arith.constant 0 : i32
    return %arg0, %arg1 : i32, i32
  }
}

</mosaic_0001>

<llo_original>
// kernel: gqa_forward.4
$region0: #{gqa_forward.4}
  #allocation0 [shape = 'u32[]', space=smem, size = 0x4, offset = 0x4, fixed_abs, tag = 'smem constant byte address 0x4 - core index']
  #allocation1 [shape = 'u32[144,128]{1,0:T(1,128)}', space=vmem, size = 0x12000, scoped, tag = 'internal scratch']
  #allocation2 [shape = 'f32[32,128]{1,0:T(8,128)}', space=vmem, size = 0x4000, scoped, tag = 'scratch operand']
  %s0 = inlined_call_operand.vmem [shape: bf16[32,64], index: 0, kind: input, shape index: {}]
  %s1 = inlined_call_operand.vmem [shape: bf16[128,64], index: 1, kind: input, shape index: {}]
  %s2 = inlined_call_operand.vmem [shape: bf16[32,128], index: 2, kind: output, shape index: {}]
  %s3 = sld [smem:[#allocation0]]
  $region26: #{gqa_forward.4} parent=0
    _
  %s5 = ssub.s32 1, %s3
  %s6 = scalar_select 0, %s5, %s3
  // Predicated region
  $region2: #{gqa_forward.4} parent=0 // pred_check
    _
  $region3: #{gqa_forward.4} parent=0 // pred_check_branch
    %8 = sbr.rel (0) target = $region5
  $region4: #{gqa_forward.4} parent=0 // pred_region
    _
  $region5: #{gqa_forward.4} parent=0 // pred_fallthru
    _
  // Predicated region
  $region6: #{gqa_forward.4} parent=0 // pred_check
    _
  $region7: #{gqa_forward.4} parent=0 // pred_check_branch
    %10 = sbr.rel (0) target = $region9
  $region8: #{gqa_forward.4} parent=0 // pred_region
    _
  $region9: #{gqa_forward.4} parent=0 // pred_fallthru
    _
  %p12 = scmp.eq.s32.totalorder 0, 0
  // Predicated region
  $region10: #{gqa_forward.4} parent=0 // pred_check
    %p13 = pneg %p12
  $region11: #{gqa_forward.4} parent=0 // pred_check_branch
    %15 = sbr.rel (%p13) target = $region13
  $region12: #{gqa_forward.4} parent=0 // pred_region
    %16 = vst [vmem:[#allocation2] sm:$0xff] 0.0
    %17 = vst [vmem:[#allocation2 + $0x8] sm:$0xff] 0.0
    %18 = vst [vmem:[#allocation2 + $0x10] sm:$0xff] 0.0
    %19 = vst [vmem:[#allocation2 + $0x18] sm:$0xff] 0.0
  $region13: #{gqa_forward.4} parent=0 // pred_fallthru
    _
  %v20 = vld [vmem:[#allocation2] sm:$0xff]
  %v21 = vld [vmem:[#allocation2 + $0x8] sm:$0xff]
  %v22 = vld [vmem:[#allocation2 + $0x10] sm:$0xff]
  %v23 = vld [vmem:[#allocation2 + $0x18] sm:$0xff]
  %v24 = vld [vmem:[%s0] sm:$0xf]
  %v25 = vld [vmem:[%s0 + $0x4] sm:$0xf]
  %v26 = vld [vmem:[%s0 + $0x8] sm:$0xf]
  %v27 = vld [vmem:[%s0 + $0xc] sm:$0xf]
  %v28 = vld [vmem:[%s1] sm:$0xf]
  %v29 = vld [vmem:[%s1 + $0x4] sm:$0xf]
  %v30 = vld [vmem:[%s1 + $0x8] sm:$0xf]
  %v31 = vld [vmem:[%s1 + $0xc] sm:$0xf]
  %v32 = vld [vmem:[%s1 + $0x10] sm:$0xf]
  %v33 = vld [vmem:[%s1 + $0x14] sm:$0xf]
  %v34 = vld [vmem:[%s1 + $0x18] sm:$0xf]
  %v35 = vld [vmem:[%s1 + $0x1c] sm:$0xf]
  %v36 = vld [vmem:[%s1 + $0x20] sm:$0xf]
  %v37 = vld [vmem:[%s1 + $0x24] sm:$0xf]
  %v38 = vld [vmem:[%s1 + $0x28] sm:$0xf]
  %v39 = vld [vmem:[%s1 + $0x2c] sm:$0xf]
  %v40 = vld [vmem:[%s1 + $0x30] sm:$0xf]
  %v41 = vld [vmem:[%s1 + $0x34] sm:$0xf]
  %v42 = vld [vmem:[%s1 + $0x38] sm:$0xf]
  %v43 = vld [vmem:[%s1 + $0x3c] sm:$0xf]
  %v48 = vunpack.c.l.b16 %v24
  %v49 = vunpack.c.l.b16 %v25
  %v50 = vunpack.c.l.b16 %v26
  %v51 = vunpack.c.l.b16 %v27
  %v52 = vpack.c.b16 %v49, %v48
  %v53 = vpack.c.b16 %v51, %v50
  %v70 = vunpack.c.l.b16 %v28
  %v71 = vunpack.c.l.b16 %v29
  %v72 = vunpack.c.l.b16 %v30
  %v73 = vunpack.c.l.b16 %v31
  %v74 = vunpack.c.l.b16 %v32
  %v75 = vunpack.c.l.b16 %v33
  %v76 = vunpack.c.l.b16 %v34
  %v77 = vunpack.c.l.b16 %v35
  %v78 = vunpack.c.l.b16 %v36
  %v79 = vunpack.c.l.b16 %v37
  %v80 = vunpack.c.l.b16 %v38
  %v81 = vunpack.c.l.b16 %v39
  %v82 = vunpack.c.l.b16 %v40
  %v83 = vunpack.c.l.b16 %v41
  %v84 = vunpack.c.l.b16 %v42
  %v85 = vunpack.c.l.b16 %v43
  %v86 = vpack.c.b16 %v71, %v70
  %v87 = vpack.c.b16 %v73, %v72
  %v88 = vpack.c.b16 %v75, %v74
  %v89 = vpack.c.b16 %v77, %v76
  %v90 = vpack.c.b16 %v79, %v78
  %v91 = vpack.c.b16 %v81, %v80
  %v92 = vpack.c.b16 %v83, %v82
  %v93 = vpack.c.b16 %v85, %v84
  %vm94 = vcmask 523264
  %v96 = vsel %vm94, %v52, 0
  %v99 = vsel %vm94, %v53, 0
  %v102 = vsel %vm94, %v86, 0
  %v105 = vsel %vm94, %v87, 0
  %v108 = vsel %vm94, %v88, 0
  %v111 = vsel %vm94, %v89, 0
  %v114 = vsel %vm94, %v90, 0
  %v117 = vsel %vm94, %v91, 0
  %v120 = vsel %vm94, %v92, 0
  %v123 = vsel %vm94, %v93, 0
  %125 = vmatprep.subr.bf16.mxu0 0
  %126 = vmatpush1.bf16.xpose.msra.mxu0 %v102
  %127 = vmatprep.subr.bf16.mxu0 0
  %128 = vmatpush1.bf16.xpose.msra.mxu0 %v105
  %129 = vmatprep.subr.bf16.mxu0 0
  %130 = vmatpush1.bf16.xpose.msra.mxu0 %v108
  %131 = vmatprep.subr.bf16.mxu0 0
  %132 = vmatpush1.bf16.xpose.msra.mxu0 %v111
  %133 = vmatprep.subr.bf16.mxu0 0
  %134 = vmatpush1.bf16.xpose.msra.mxu0 %v114
  %135 = vmatprep.subr.bf16.mxu0 0
  %136 = vmatpush1.bf16.xpose.msra.mxu0 %v117
  %137 = vmatprep.subr.bf16.mxu0 0
  %138 = vmatpush1.bf16.xpose.msra.mxu0 %v120
  %139 = vmatprep.subr.bf16.mxu0 0
  %140 = vmatpush1.bf16.xpose.msra.mxu0 %v123
  %141 = vmatprep.subr.bf16.mxu0 0
  %142 = vmatpush1.bf16.xpose.msra.mxu0 0
  %143 = vmatprep.subr.bf16.mxu0 0
  %144 = vmatpush1.bf16.xpose.msra.mxu0 0
  %145 = vmatprep.subr.bf16.mxu0 0
  %146 = vmatpush1.bf16.xpose.msra.mxu0 0
  %147 = vmatprep.subr.bf16.mxu0 0
  %148 = vmatpush1.bf16.xpose.msra.mxu0 0
  %149 = vmatprep.subr.bf16.mxu0 0
  %150 = vmatpush1.bf16.xpose.msra.mxu0 0
  %151 = vmatprep.subr.bf16.mxu0 0
  %152 = vmatpush1.bf16.xpose.msra.mxu0 0
  %153 = vmatprep.subr.bf16.mxu0 0
  %154 = vmatpush1.bf16.xpose.msra.mxu0 0
  %155 = vmatprep.subr.bf16.mxu0 0
  %156 = vmatpush1.bf16.xpose.msra.mxu0 0
  %157 = vmatprep.mubr.bf16.mxu0 0
  %158 = vmatmul.mubr.bf16.gmra.mrb[0].mxu0 %v96
  %v159 = vpop.f32.mrb[0].mxu0
  %v160 = vadd.f32 0.0, %v159
  %v161 = vpop.f32.mrb[0].mxu0
  %v162 = vpop.f32.mrb[0].mxu0
  %v163 = vadd.f32 0.0, %v162
  %v164 = vpop.f32.mrb[0].mxu0
  %165 = vmatprep.mubr.bf16.mxu0 0
  %166 = vmatmul.mubr.bf16.gmra.mrb[0].mxu0 %v99
  %v167 = vpop.f32.mrb[0].mxu0
  %v168 = vadd.f32 0.0, %v167
  %v169 = vpop.f32.mrb[0].mxu0
  %v170 = vpop.f32.mrb[0].mxu0
  %v171 = vadd.f32 0.0, %v170
  %v172 = vpop.f32.mrb[0].mxu0
  %173 = vdwg.mxu0
  %v174 = vadd.f32 %v20, %v160
  %v175 = vadd.f32 %v21, %v163
  %v176 = vadd.f32 %v22, %v168
  %v177 = vadd.f32 %v23, %v171
  %178 = vst [vmem:[#allocation2] sm:$0xff] %v174
  %179 = vst [vmem:[#allocation2 + $0x8] sm:$0xff] %v175
  %180 = vst [vmem:[#allocation2 + $0x10] sm:$0xff] %v176
  %181 = vst [vmem:[#allocation2 + $0x18] sm:$0xff] %v177
  // Predicated region
  $region14: #{gqa_forward.4} parent=0 // pred_check
    %p182 = pneg %p12
  $region15: #{gqa_forward.4} parent=0 // pred_check_branch
    %184 = sbr.rel (%p182) target = $region17
  $region16: #{gqa_forward.4} parent=0 // pred_region
    %v185 = vld [vmem:[#allocation2] sm:$0xff]
    %v186 = vld [vmem:[#allocation2 + $0x8] sm:$0xff]
    %v187 = vld [vmem:[#allocation2 + $0x10] sm:$0xff]
    %v188 = vld [vmem:[#allocation2 + $0x18] sm:$0xff]
    %v189 = vpack.c.bf16 %v186, %v185
    %v190 = vpack.c.bf16 %v188, %v187
    %v193 = vunpack.c.l.b16 %v189
    %v194 = vunpack.c.h.b16 %v189
    %v195 = vunpack.c.l.b16 %v190
    %v196 = vunpack.c.h.b16 %v190
    %v197 = vpack.c.b16 %v193, %v193
    %v198 = vpack.c.b16 %v194, %v194
    %v199 = vpack.c.b16 %v195, %v195
    %v200 = vpack.c.b16 %v196, %v196
    %205 = vst [vmem:[%s2] sm:$0xf] %v197
    %206 = vst [vmem:[%s2 + $0x4] sm:$0xf] %v198
    %207 = vst [vmem:[%s2 + $0x8] sm:$0xf] %v199
    %208 = vst [vmem:[%s2 + $0xc] sm:$0xf] %v200
  $region17: #{gqa_forward.4} parent=0 // pred_fallthru
    _
  // Predicated region
  $region18: #{gqa_forward.4} parent=0 // pred_check
    _
  $region19: #{gqa_forward.4} parent=0 // pred_check_branch
    %210 = sbr.rel (0) target = $region21
  $region20: #{gqa_forward.4} parent=0 // pred_region
    _
  $region21: #{gqa_forward.4} parent=0 // pred_fallthru
    _
  // Predicated region
  $region22: #{gqa_forward.4} parent=0 // pred_check
    _
  $region23: #{gqa_forward.4} parent=0 // pred_check_branch
    %212 = sbr.rel (0) target = $region25
  $region24: #{gqa_forward.4} parent=0 // pred_region
    _
  $region25: #{gqa_forward.4} parent=0 // pred_fallthru
    _

// kernel: gqa_forward.5
$region0: #{gqa_forward.5}
  #allocation0 [shape = 'u32[]', space=smem, size = 0x4, offset = 0x4, fixed_abs, tag = 'smem constant byte address 0x4 - core index']
  #allocation1 [shape = 'u32[144,128]{1,0:T(1,128)}', space=vmem, size = 0x12000, scoped, tag = 'internal scratch']
  %s0 = inlined_call_operand.vmem [shape: bf16[2,2,16,16], index: 0, kind: input, shape index: {}]
  %s1 = inlined_call_operand.vmem [shape: f32[16,8], index: 1, kind: input, shape index: {}]
  %s2 = inlined_call_operand.vmem [shape: f32[16,8], index: 2, kind: input, shape index: {}]
  %s3 = inlined_call_operand.vmem [shape: bf16[2,2,16,16], index: 3, kind: output, shape index: {}]
  %s4 = sld [smem:[#allocation0]]
  $region45: #{gqa_forward.5} parent=0
    _
  %s6 = ssub.s32 1, %s4
  %s7 = scalar_select 0, %s6, %s4
  loop: start=0, step=1, limit=4
  $region2: #{gqa_forward.5} parent=0 // loop_pre_header
    _
  $region3: #{gqa_forward.5} parent=0 // loop_header
    %s9 = sphi 0, %s13
    %p10 = scmp.ge.s32.totalorder %s9, 4
    %s16 = sphi 0, %s28
    %s17 = sphi 0, %s24
    %s18 = sphi 0, %s16
    %s19 = sphi 0, %s17
    %s20 = sphi 0, %s18
    %s21 = sphi 0, %s19
    %s33 = sphi 0, %s35
    %s36 = sphi 0, %s33
    %s37 = sphi 0, %s36
    %s53 = sphi 0, %s37
    %s59 = sphi 0, %s61
    %s62 = sphi 0, %s59
    %s63 = sphi 0, %s62
    %s79 = sphi 0, %s63
    %s85 = sphi 0, %s87
    %s88 = sphi 0, %s85
    %s89 = sphi 0, %s88
    %s105 = sphi 0, %s89
    %s113 = sphi 0, %s115
    %s116 = sphi 0, %s113
    %s117 = sphi 0, %s116
    %s133 = sphi 0, %s117
  $region4: #{gqa_forward.5} parent=0 // loop_header_branch
    %12 = sbr.rel (%p10) target = $region8
  $region5: #{gqa_forward.5} parent=0 // loop_body
    %s14 = ssub.s32 %s9, 1
    %s15 = ssub.s32 %s9, 2
    %s22 = sadd.s32 1, %s17
    %p23 = scmp.ge.s32.totalorder %s22, 1
    %s24 = scalar_select %p23, 0, %s22
    %s25 = sadd.s32 1, %s16
    %s26 = scalar_select %p23, %s25, %s16
    %p27 = scmp.ge.s32.totalorder %s26, 2
    %s28 = scalar_select %p27, 0, %s26
    %s29 = ssub.s32 %s16, %s28
    %s30 = ssub.s32 %s17, %s24
    %s31 = sor.u32 %s29, %s30
    %p32 = scmp.eq.s32.totalorder %s31, 0
    %s34 = sadd.s32 %s33, 1
    %s35 = scalar_select %p32, %s33, %s34
    %p38 = pneg %p32
    %p39 = scmp.eq.s32.totalorder %s9, 1
    %p40 = por %p38, %p39
    %p41 = scmp.ne.s32.totalorder %s33, %s36
    %p42 = scmp.eq.s32.totalorder %s9, 0
    %p43 = por %p41, %p42
    %p44 = scmp.ne.s32.totalorder %s33, %s36
    %p45 = scmp.eq.s32.totalorder %s14, 1
    %p46 = por %p44, %p45
    %p47 = scmp.ne.s32.totalorder %s36, %s37
    %p48 = scmp.eq.s32.totalorder %s14, 0
    %p49 = por %p47, %p48
    %p50 = scmp.ne.s32.totalorder %s36, %s37
    %p51 = scmp.eq.s32.totalorder %s15, 1
    %p52 = por %p50, %p51
    %p54 = scmp.ne.s32.totalorder %s37, %s53
    %p55 = scmp.eq.s32.totalorder %s15, 0
    %p56 = por %p54, %p55
    %s57 = ssub.s32 %s17, %s24
    %p58 = scmp.eq.s32.totalorder %s57, 0
    %s60 = sadd.s32 %s59, 1
    %s61 = scalar_select %p58, %s59, %s60
    %p64 = pneg %p58
    %p65 = scmp.eq.s32.totalorder %s9, 1
    %p66 = por %p64, %p65
    %p67 = scmp.ne.s32.totalorder %s59, %s62
    %p68 = scmp.eq.s32.totalorder %s9, 0
    %p69 = por %p67, %p68
    %p70 = scmp.ne.s32.totalorder %s59, %s62
    %p71 = scmp.eq.s32.totalorder %s14, 1
    %p72 = por %p70, %p71
    %p73 = scmp.ne.s32.totalorder %s62, %s63
    %p74 = scmp.eq.s32.totalorder %s14, 0
    %p75 = por %p73, %p74
    %p76 = scmp.ne.s32.totalorder %s62, %s63
    %p77 = scmp.eq.s32.totalorder %s15, 1
    %p78 = por %p76, %p77
    %p80 = scmp.ne.s32.totalorder %s63, %s79
    %p81 = scmp.eq.s32.totalorder %s15, 0
    %p82 = por %p80, %p81
    %s83 = ssub.s32 %s17, %s24
    %p84 = scmp.eq.s32.totalorder %s83, 0
    %s86 = sadd.s32 %s85, 1
    %s87 = scalar_select %p84, %s85, %s86
    %p90 = pneg %p84
    %p91 = scmp.eq.s32.totalorder %s9, 1
    %p92 = por %p90, %p91
    %p93 = scmp.ne.s32.totalorder %s85, %s88
    %p94 = scmp.eq.s32.totalorder %s9, 0
    %p95 = por %p93, %p94
    %p96 = scmp.ne.s32.totalorder %s85, %s88
    %p97 = scmp.eq.s32.totalorder %s14, 1
    %p98 = por %p96, %p97
    %p99 = scmp.ne.s32.totalorder %s88, %s89
    %p100 = scmp.eq.s32.totalorder %s14, 0
    %p101 = por %p99, %p100
    %p102 = scmp.ne.s32.totalorder %s88, %s89
    %p103 = scmp.eq.s32.totalorder %s15, 1
    %p104 = por %p102, %p103
    %p106 = scmp.ne.s32.totalorder %s89, %s105
    %p107 = scmp.eq.s32.totalorder %s15, 0
    %p108 = por %p106, %p107
    %s109 = ssub.s32 %s16, %s28
    %s110 = ssub.s32 %s17, %s24
    %s111 = sor.u32 %s109, %s110
    %p112 = scmp.eq.s32.totalorder %s111, 0
    %s114 = sadd.s32 %s113, 1
    %s115 = scalar_select %p112, %s113, %s114
    %p118 = pneg %p112
    %p119 = scmp.eq.s32.totalorder %s9, 1
    %p120 = por %p118, %p119
    %p121 = scmp.ne.s32.totalorder %s113, %s116
    %p122 = scmp.eq.s32.totalorder %s9, 0
    %p123 = por %p121, %p122
    %p124 = scmp.ne.s32.totalorder %s113, %s116
    %p125 = scmp.eq.s32.totalorder %s14, 1
    %p126 = por %p124, %p125
    %p127 = scmp.ne.s32.totalorder %s116, %s117
    %p128 = scmp.eq.s32.totalorder %s14, 0
    %p129 = por %p127, %p128
    %p130 = scmp.ne.s32.totalorder %s116, %s117
    %p131 = scmp.eq.s32.totalorder %s15, 1
    %p132 = por %p130, %p131
    %p134 = scmp.ne.s32.totalorder %s117, %s133
    %p135 = scmp.eq.s32.totalorder %s15, 0
    %p136 = por %p134, %p135
    %p137 = scmp.le.s32.totalorder 1, %s9
    %p138 = scmp.lt.s32.totalorder %s9, 3
    %p139 = pnand %p137, %p138
    %p140 = pneg %p139
    // Predicated region
    $region9: #{gqa_forward.5} parent=5 // pred_check
      _
    $region10: #{gqa_forward.5} parent=5 // pred_check_branch
      %142 = sbr.rel (%p139) target = $region12
    $region11: #{gqa_forward.5} parent=5 // pred_region
      %s143 = ssub.s32 %s9, 1
      // Predicated region
      $region13: #{gqa_forward.5} parent=11 // pred_check
        %p144 = pneg %p75
      $region14: #{gqa_forward.5} parent=11 // pred_check_branch
        %146 = sbr.rel (%p144) target = $region16
      $region15: #{gqa_forward.5} parent=11 // pred_region
        %s147 = smul.u32 2, %s19
        %p148 = scmp.lt.s32.totalorder %s147, 1
        %s149 = scalar_select %p148, %s147, 1
        %s150 = smul.addr %s149, 8
        %s151 = scalar_lea.vmem %s1, %s150
        %s152 = smul.u32 2, %s19
      $region16: #{gqa_forward.5} parent=11 // pred_fallthru
        _
      // Predicated region
      $region17: #{gqa_forward.5} parent=11 // pred_check
        %p153 = pneg %p101
      $region18: #{gqa_forward.5} parent=11 // pred_check_branch
        %155 = sbr.rel (%p153) target = $region20
      $region19: #{gqa_forward.5} parent=11 // pred_region
        %s156 = smul.u32 2, %s19
        %p157 = scmp.lt.s32.totalorder %s156, 1
        %s158 = scalar_select %p157, %s156, 1
        %s159 = smul.addr %s158, 8
        %s160 = scalar_lea.vmem %s2, %s159
        %s161 = smul.u32 2, %s19
      $region20: #{gqa_forward.5} parent=11 // pred_fallthru
        _
    $region12: #{gqa_forward.5} parent=5 // pred_fallthru
      _
    %p162 = scmp.lt.s32.totalorder %s9, 2
    // Predicated region
    $region21: #{gqa_forward.5} parent=5 // pred_check
      %p163 = pneg %p162
    $region22: #{gqa_forward.5} parent=5 // pred_check_branch
      %165 = sbr.rel (%p163) target = $region24
    $region23: #{gqa_forward.5} parent=5 // pred_region
      // Predicated region
      $region25: #{gqa_forward.5} parent=23 // pred_check
        %p166 = pneg %p43
      $region26: #{gqa_forward.5} parent=23 // pred_check_branch
        %168 = sbr.rel (%p166) target = $region28
      $region27: #{gqa_forward.5} parent=23 // pred_region
        %s169 = smul.u32 2, %s17
        %p170 = scmp.lt.s32.totalorder %s16, 1
        %s171 = scalar_select %p170, %s16, 1
        %p172 = scmp.lt.s32.totalorder %s169, 1
        %s173 = scalar_select %p172, %s169, 1
        %s174 = smul.addr %s171, 4
        %s175 = sadd.s32 %s173, %s174
        %s176 = smul.addr %s175, 4
        %s177 = scalar_lea.vmem %s0, %s176
        %s178 = smul.u32 2, %s17
      $region28: #{gqa_forward.5} parent=23 // pred_fallthru
        _
    $region24: #{gqa_forward.5} parent=5 // pred_fallthru
      _
    %p179 = scmp.le.s32.totalorder 1, %s9
    %p180 = scmp.lt.s32.totalorder %s9, 3
    %p181 = pnand %p179, %p180
    %p182 = pneg %p181
    // Predicated region
    $region29: #{gqa_forward.5} parent=5 // pred_check
      _
    $region30: #{gqa_forward.5} parent=5 // pred_check_branch
      %184 = sbr.rel (%p181) target = $region32
    $region31: #{gqa_forward.5} parent=5 // pred_region
      %s185 = ssub.s32 %s9, 1
      %s186 = smul.u32 2, %s19
      %p187 = scmp.lt.s32.totalorder %s18, 1
      %s188 = scalar_select %p187, %s18, 1
      %p189 = scmp.lt.s32.totalorder %s186, 1
      %s190 = scalar_select %p189, %s186, 1
      %s191 = smul.addr %s188, 4
      %s192 = sadd.s32 %s190, %s191
      %s193 = smul.addr %s192, 4
      %s194 = scalar_lea.vmem %s0, %s193
      %p195 = pneg %p49
      %p196 = pneg %p46
      %s197 = smul.u32 2, %s19
      %p198 = scmp.lt.s32.totalorder %s197, 1
      %s199 = scalar_select %p198, %s197, 1
      %s200 = smul.addr %s199, 8
      %s201 = scalar_lea.vmem %s1, %s200
      %p202 = pneg %p75
      %p203 = pneg %p72
      %s204 = smul.u32 2, %s19
      %p205 = scmp.lt.s32.totalorder %s204, 1
      %s206 = scalar_select %p205, %s204, 1
      %s207 = smul.addr %s206, 8
      %s208 = scalar_lea.vmem %s2, %s207
      %p209 = pneg %p101
      %p210 = pneg %p98
      %p211 = pneg %p129
      %p212 = pneg %p126
      %s213 = smul.u32 2, %s19
      %p214 = scmp.lt.s32.totalorder %s18, 1
      %s215 = scalar_select %p214, %s18, 1
      %p216 = scmp.lt.s32.totalorder %s213, 1
      %s217 = scalar_select %p216, %s213, 1
      %s218 = smul.addr %s215, 4
      %s219 = sadd.s32 %s217, %s218
      %s220 = smul.addr %s219, 4
      %s221 = scalar_lea.vmem %s3, %s220
      %s222 = smul.u32 2, %s19
      %p223 = scmp.lt.s32.totalorder %s18, 1
      %s224 = scalar_select %p223, %s18, 1
      %p225 = scmp.lt.s32.totalorder %s222, 1
      %s226 = scalar_select %p225, %s222, 1
      %s227 = smul.addr %s224, 4
      %s228 = sadd.s32 %s226, %s227
      %s229 = smul.addr %s228, 4
      %s230 = scalar_lea.vmem %s0, %s229
      %s231 = smul.u32 2, %s19
      %s232 = smul.u32 2, %s19
      %p233 = scmp.lt.s32.totalorder %s232, 1
      %s234 = scalar_select %p233, %s232, 1
      %s235 = smul.addr %s234, 8
      %s236 = scalar_lea.vmem %s1, %s235
      %s237 = smul.u32 2, %s19
      %s238 = smul.u32 2, %s19
      %p239 = scmp.lt.s32.totalorder %s238, 1
      %s240 = scalar_select %p239, %s238, 1
      %s241 = smul.addr %s240, 8
      %s242 = scalar_lea.vmem %s2, %s241
      %s243 = smul.u32 2, %s19
      %s244 = smul.u32 2, %s19
      %p245 = scmp.lt.s32.totalorder %s18, 1
      %s246 = scalar_select %p245, %s18, 1
      %p247 = scmp.lt.s32.totalorder %s244, 1
      %s248 = scalar_select %p247, %s244, 1
      %s249 = smul.addr %s246, 4
      %s250 = sadd.s32 %s248, %s249
      %s251 = smul.addr %s250, 4
      %s252 = scalar_lea.vmem %s3, %s251
      %s253 = smul.u32 2, %s19
      %v254 = vld [vmem:[%s230] sm:$0xf]
      %v255 = vld [vmem:[%s230 + $0x4] sm:$0xf]
      %v256 = vld [vmem:[%s230 + $0x8] sm:$0xf]
      %v257 = vld [vmem:[%s230 + $0xc] sm:$0xf]
      %v258 = vunpack.c.l.bf16 %v254
      %v259 = vunpack.c.l.bf16 %v255
      %v260 = vunpack.c.l.bf16 %v256
      %v261 = vunpack.c.l.bf16 %v257
      %v262 = vld [vmem:[%s236] sm:$0xff]
      %v263 = vld [vmem:[%s236 + $0x8] sm:$0xff]
      %v264 = vld [vmem:[%s242] sm:$0xff]
      %v265 = vld [vmem:[%s242 + $0x8] sm:$0xff]
      %v266 = vmul.f32 %v258, %v262
      %v267 = vmul.f32 %v259, %v263
      %v268 = vmul.f32 %v260, %v262
      %v269 = vmul.f32 %v261, %v263
      %272 = vrot.lane.b32.xlu0 %v264, 8
      %v273 = vpop.permute.xlu0 %272
      %274 = vrot.lane.b32.xlu0 %v265, 8
      %v275 = vpop.permute.xlu0 %274
      %v278 = vmul.f32 %v258, %v273
      %v279 = vmul.f32 %v259, %v275
      %v280 = vmul.f32 %v260, %v273
      %v281 = vmul.f32 %v261, %v275
      %286 = vrot.lane.b32.xlu0 %v278, 120
      %v287 = vpop.permute.xlu0 %286
      %288 = vrot.lane.b32.xlu0 %v279, 120
      %v289 = vpop.permute.xlu0 %288
      %290 = vrot.lane.b32.xlu0 %v280, 120
      %v291 = vpop.permute.xlu0 %290
      %292 = vrot.lane.b32.xlu0 %v281, 120
      %v293 = vpop.permute.xlu0 %292
      %v298 = vsub.f32 %v266, %v287
      %v299 = vsub.f32 %v267, %v289
      %v300 = vsub.f32 %v268, %v291
      %v301 = vsub.f32 %v269, %v293
      %304 = vrot.lane.b32.xlu0 %v262, 8
      %v305 = vpop.permute.xlu0 %304
      %306 = vrot.lane.b32.xlu0 %v263, 8
      %v307 = vpop.permute.xlu0 %306
      %v310 = vmul.f32 %v258, %v305
      %v311 = vmul.f32 %v259, %v307
      %v312 = vmul.f32 %v260, %v305
      %v313 = vmul.f32 %v261, %v307
      %v314 = vmul.f32 %v258, %v264
      %v315 = vmul.f32 %v259, %v265
      %v316 = vmul.f32 %v260, %v264
      %v317 = vmul.f32 %v261, %v265
      %322 = vrot.lane.b32.xlu0 %v314, 8
      %v323 = vpop.permute.xlu0 %322
      %324 = vrot.lane.b32.xlu0 %v315, 8
      %v325 = vpop.permute.xlu0 %324
      %326 = vrot.lane.b32.xlu0 %v316, 8
      %v327 = vpop.permute.xlu0 %326
      %328 = vrot.lane.b32.xlu0 %v317, 8
      %v329 = vpop.permute.xlu0 %328
      %v334 = vadd.f32 %v310, %v323
      %v335 = vadd.f32 %v311, %v325
      %v336 = vadd.f32 %v312, %v327
      %v337 = vadd.f32 %v313, %v329
      %vm338 = vcmask 64512
      %v339 = vsel %vm338, %v298, %v334
      %v340 = vsel %vm338, %v299, %v335
      %v341 = vsel %vm338, %v300, %v336
      %v342 = vsel %vm338, %v301, %v337
      %v343 = vpack.c.bf16 %v340, %v339
      %v344 = vpack.c.bf16 %v342, %v341
      %v347 = vunpack.c.l.b16 %v343
      %v348 = vunpack.c.h.b16 %v343
      %v349 = vunpack.c.l.b16 %v344
      %v350 = vunpack.c.h.b16 %v344
      %v351 = vpack.c.b16 %v347, %v347
      %v352 = vpack.c.b16 %v348, %v348
      %v353 = vpack.c.b16 %v349, %v349
      %v354 = vpack.c.b16 %v350, %v350
      %vm359 = vcmask 125952
      %360 = vst.msk [vmem:[%s252] sm:$0xf] %vm359, %v351
      %361 = vst.msk [vmem:[%s252 + $0x4] sm:$0xf] %vm359, %v352
      %362 = vst.msk [vmem:[%s252 + $0x8] sm:$0xf] %vm359, %v353
      %363 = vst.msk [vmem:[%s252 + $0xc] sm:$0xf] %vm359, %v354
      %s364 = smul.u32 2, %s19
      %p365 = scmp.lt.s32.totalorder %s18, 1
      %s366 = scalar_select %p365, %s18, 1
      %p367 = scmp.lt.s32.totalorder %s364, 1
      %s368 = scalar_select %p367, %s364, 1
      %s369 = smul.addr %s366, 4
      %s370 = sadd.s32 %s368, %s369
      %s371 = smul.addr %s370, 4
      %s372 = scalar_lea.vmem %s3, %s371
      // Predicated region
      $region33: #{gqa_forward.5} parent=31 // pred_check
        %p373 = pneg %p126
      $region34: #{gqa_forward.5} parent=31 // pred_check_branch
        %375 = sbr.rel (%p373) target = $region36
      $region35: #{gqa_forward.5} parent=31 // pred_region
        %s376 = smul.u32 2, %s19
      $region36: #{gqa_forward.5} parent=31 // pred_fallthru
        _
    $region32: #{gqa_forward.5} parent=5 // pred_fallthru
      _
    %p377 = scmp.le.s32.totalorder 2, %s9
    // Predicated region
    $region37: #{gqa_forward.5} parent=5 // pred_check
      %p378 = pneg %p377
    $region38: #{gqa_forward.5} parent=5 // pred_check_branch
      %380 = sbr.rel (%p378) target = $region40
    $region39: #{gqa_forward.5} parent=5 // pred_region
      %s381 = ssub.s32 %s9, 2
      // Predicated region
      $region41: #{gqa_forward.5} parent=39 // pred_check
        %p382 = pneg %p132
      $region42: #{gqa_forward.5} parent=39 // pred_check_branch
        %384 = sbr.rel (%p382) target = $region44
      $region43: #{gqa_forward.5} parent=39 // pred_region
        %s385 = smul.u32 2, %s21
        %p386 = scmp.lt.s32.totalorder %s20, 1
        %s387 = scalar_select %p386, %s20, 1
        %p388 = scmp.lt.s32.totalorder %s385, 1
        %s389 = scalar_select %p388, %s385, 1
        %s390 = smul.addr %s387, 4
        %s391 = sadd.s32 %s389, %s390
        %s392 = smul.addr %s391, 4
        %s393 = scalar_lea.vmem %s3, %s392
      $region44: #{gqa_forward.5} parent=39 // pred_fallthru
        _
    $region40: #{gqa_forward.5} parent=5 // pred_fallthru
      _
  $region6: #{gqa_forward.5} parent=0 // loop_footer
    %s13 = sadd.s32 1, %s9
  $region7: #{gqa_forward.5} parent=0 // loop_footer_branch
    %8 = sbr.rel target = $region3
  $region8: #{gqa_forward.5} parent=0 // loop_exit
    _

// kernel: gqa_forward.7
$region0: #{gqa_forward.7}
  #allocation0 [shape = 'u32[]', space=smem, size = 0x4, offset = 0x4, fixed_abs, tag = 'smem constant byte address 0x4 - core index']
  #allocation1 [shape = 'u32[144,128]{1,0:T(1,128)}', space=vmem, size = 0x12000, scoped, tag = 'internal scratch']
  #allocation2 [shape = 'f32[32,64]{1,0:T(8,128)}', space=vmem, size = 0x4000, scoped, tag = 'scratch operand']
  %s0 = inlined_call_operand.vmem [shape: bf16[32,64], index: 0, kind: input, shape index: {}]
  %s1 = inlined_call_operand.vmem [shape: bf16[64,64], index: 1, kind: input, shape index: {}]
  %s2 = inlined_call_operand.hbm [shape: f32[32,64], index: 2, kind: output, shape index: {}]
  %s3 = sld [smem:[#allocation0]]
  $region26: #{gqa_forward.7} parent=0
    _
  %s5 = ssub.s32 1, %s3
  %s6 = scalar_select 0, %s5, %s3
  $region1: #{gqa_forward.7} parent=0
    #allocation3 [shape = 'u8[16384]{0}', space=vmem, size = 0x4000, scoped, tag = 'output window, operand 0, single buffered']
    #allocation4 [shape = 's32[1]{0}', space=sflag, size = 0x4, scoped, tag = 'scoped memory for gqa_forward.7']
    %7 = vsyncpa [#allocation4], 0
    // Predicated region
    $region2: #{gqa_forward.7} parent=1 // pred_check
      _
    $region3: #{gqa_forward.7} parent=1 // pred_check_branch
      %9 = sbr.rel (0) target = $region5
    $region4: #{gqa_forward.7} parent=1 // pred_region
      _
    $region5: #{gqa_forward.7} parent=1 // pred_fallthru
      _
    // Predicated region
    $region6: #{gqa_forward.7} parent=1 // pred_check
      _
    $region7: #{gqa_forward.7} parent=1 // pred_check_branch
      %11 = sbr.rel (0) target = $region9
    $region8: #{gqa_forward.7} parent=1 // pred_region
      _
    $region9: #{gqa_forward.7} parent=1 // pred_fallthru
      _
    %p13 = scmp.eq.s32.totalorder 0, 0
    // Predicated region
    $region10: #{gqa_forward.7} parent=1 // pred_check
      %p14 = pneg %p13
    $region11: #{gqa_forward.7} parent=1 // pred_check_branch
      %16 = sbr.rel (%p14) target = $region13
    $region12: #{gqa_forward.7} parent=1 // pred_region
      %vm17 = vcmask 523264
      %18 = vst.msk [vmem:[#allocation2] sm:$0xff] %vm17, 0.0
      %19 = vst.msk [vmem:[#allocation2 + $0x8] sm:$0xff] %vm17, 0.0
      %20 = vst.msk [vmem:[#allocation2 + $0x10] sm:$0xff] %vm17, 0.0
      %21 = vst.msk [vmem:[#allocation2 + $0x18] sm:$0xff] %vm17, 0.0
    $region13: #{gqa_forward.7} parent=1 // pred_fallthru
      _
    %v22 = vld [vmem:[#allocation2] sm:$0xff]
    %v23 = vld [vmem:[#allocation2 + $0x8] sm:$0xff]
    %v24 = vld [vmem:[#allocation2 + $0x10] sm:$0xff]
    %v25 = vld [vmem:[#allocation2 + $0x18] sm:$0xff]
    %v26 = vld [vmem:[%s0] sm:$0xf]
    %v27 = vld [vmem:[%s0 + $0x4] sm:$0xf]
    %v28 = vld [vmem:[%s0 + $0x8] sm:$0xf]
    %v29 = vld [vmem:[%s0 + $0xc] sm:$0xf]
    %v30 = vld [vmem:[%s1] sm:$0xf]
    %v31 = vld [vmem:[%s1 + $0x4] sm:$0xf]
    %v32 = vld [vmem:[%s1 + $0x8] sm:$0xf]
    %v33 = vld [vmem:[%s1 + $0xc] sm:$0xf]
    %v34 = vld [vmem:[%s1 + $0x10] sm:$0xf]
    %v35 = vld [vmem:[%s1 + $0x14] sm:$0xf]
    %v36 = vld [vmem:[%s1 + $0x18] sm:$0xf]
    %v37 = vld [vmem:[%s1 + $0x1c] sm:$0xf]
    %v42 = vunpack.c.l.b16 %v26
    %v43 = vunpack.c.l.b16 %v27
    %v44 = vunpack.c.l.b16 %v28
    %v45 = vunpack.c.l.b16 %v29
    %v46 = vpack.c.b16 %v43, %v42
    %v47 = vpack.c.b16 %v45, %v44
    %v56 = vunpack.c.l.b16 %v30
    %v57 = vunpack.c.l.b16 %v31
    %v58 = vunpack.c.l.b16 %v32
    %v59 = vunpack.c.l.b16 %v33
    %v60 = vunpack.c.l.b16 %v34
    %v61 = vunpack.c.l.b16 %v35
    %v62 = vunpack.c.l.b16 %v36
    %v63 = vunpack.c.l.b16 %v37
    %v64 = vpack.c.b16 %v57, %v56
    %v65 = vpack.c.b16 %v59, %v58
    %v66 = vpack.c.b16 %v61, %v60
    %v67 = vpack.c.b16 %v63, %v62
    %vm68 = vcmask 523264
    %v70 = vsel %vm68, %v46, 0
    %v73 = vsel %vm68, %v47, 0
    %v76 = vsel %vm68, %v64, 0
    %v79 = vsel %vm68, %v65, 0
    %v82 = vsel %vm68, %v66, 0
    %v85 = vsel %vm68, %v67, 0
    %87 = vmatprep.subr.bf16.mxu0 0
    %88 = vmatpush1.bf16.xpose.msra.mxu0 %v76
    %89 = vmatprep.subr.bf16.mxu0 0
    %90 = vmatpush1.bf16.xpose.msra.mxu0 %v79
    %91 = vmatprep.subr.bf16.mxu0 0
    %92 = vmatpush1.bf16.xpose.msra.mxu0 %v82
    %93 = vmatprep.subr.bf16.mxu0 0
    %94 = vmatpush1.bf16.xpose.msra.mxu0 %v85
    %95 = vmatprep.subr.bf16.mxu0 0
    %96 = vmatpush1.bf16.xpose.msra.mxu0 0
    %97 = vmatprep.subr.bf16.mxu0 0
    %98 = vmatpush1.bf16.xpose.msra.mxu0 0
    %99 = vmatprep.subr.bf16.mxu0 0
    %100 = vmatpush1.bf16.xpose.msra.mxu0 0
    %101 = vmatprep.subr.bf16.mxu0 0
    %102 = vmatpush1.bf16.xpose.msra.mxu0 0
    %103 = vmatprep.subr.bf16.mxu0 0
    %104 = vmatpush1.bf16.xpose.msra.mxu0 0
    %105 = vmatprep.subr.bf16.mxu0 0
    %106 = vmatpush1.bf16.xpose.msra.mxu0 0
    %107 = vmatprep.subr.bf16.mxu0 0
    %108 = vmatpush1.bf16.xpose.msra.mxu0 0
    %109 = vmatprep.subr.bf16.mxu0 0
    %110 = vmatpush1.bf16.xpose.msra.mxu0 0
    %111 = vmatprep.subr.bf16.mxu0 0
    %112 = vmatpush1.bf16.xpose.msra.mxu0 0
    %113 = vmatprep.subr.bf16.mxu0 0
    %114 = vmatpush1.bf16.xpose.msra.mxu0 0
    %115 = vmatprep.subr.bf16.mxu0 0
    %116 = vmatpush1.bf16.xpose.msra.mxu0 0
    %117 = vmatprep.subr.bf16.mxu0 0
    %118 = vmatpush1.bf16.xpose.msra.mxu0 0
    %119 = vmatprep.mubr.bf16.mxu0 0
    %120 = vmatmul.mubr.bf16.gmra.mrb[0].mxu0 %v70
    %v121 = vpop.f32.mrb[0].mxu0
    %v122 = vadd.f32 0.0, %v121
    %v123 = vpop.f32.mrb[0].mxu0
    %v124 = vpop.f32.mrb[0].mxu0
    %v125 = vadd.f32 0.0, %v124
    %v126 = vpop.f32.mrb[0].mxu0
    %127 = vmatprep.mubr.bf16.mxu0 0
    %128 = vmatmul.mubr.bf16.gmra.mrb[0].mxu0 %v73
    %v129 = vpop.f32.mrb[0].mxu0
    %v130 = vadd.f32 0.0, %v129
    %v131 = vpop.f32.mrb[0].mxu0
    %v132 = vpop.f32.mrb[0].mxu0
    %v133 = vadd.f32 0.0, %v132
    %v134 = vpop.f32.mrb[0].mxu0
    %135 = vdwg.mxu0
    %v136 = vadd.f32 %v22, %v122
    %v137 = vadd.f32 %v23, %v125
    %v138 = vadd.f32 %v24, %v130
    %v139 = vadd.f32 %v25, %v133
    %140 = vst.msk [vmem:[#allocation2] sm:$0xff] %vm68, %v136
    %141 = vst.msk [vmem:[#allocation2 + $0x8] sm:$0xff] %vm68, %v137
    %142 = vst.msk [vmem:[#allocation2 + $0x10] sm:$0xff] %vm68, %v138
    %143 = vst.msk [vmem:[#allocation2 + $0x18] sm:$0xff] %vm68, %v139
    // Predicated region
    $region14: #{gqa_forward.7} parent=1 // pred_check
      %p144 = pneg %p13
    $region15: #{gqa_forward.7} parent=1 // pred_check_branch
      %146 = sbr.rel (%p144) target = $region17
    $region16: #{gqa_forward.7} parent=1 // pred_region
      %v147 = vld [vmem:[#allocation2] sm:$0xff]
      %v148 = vld [vmem:[#allocation2 + $0x8] sm:$0xff]
      %v149 = vld [vmem:[#allocation2 + $0x10] sm:$0xff]
      %v150 = vld [vmem:[#allocation2 + $0x18] sm:$0xff]
      %151 = vst.msk [vmem:[#allocation3] sm:$0xff] %vm68, %v147
      %152 = vst.msk [vmem:[#allocation3 + $0x8] sm:$0xff] %vm68, %v148
      %153 = vst.msk [vmem:[#allocation3 + $0x10] sm:$0xff] %vm68, %v149
      %154 = vst.msk [vmem:[#allocation3 + $0x18] sm:$0xff] %vm68, %v150
    $region17: #{gqa_forward.7} parent=1 // pred_fallthru
      _
    // Predicated region
    $region18: #{gqa_forward.7} parent=1 // pred_check
      _
    $region19: #{gqa_forward.7} parent=1 // pred_check_branch
      %156 = sbr.rel (0) target = $region21
    $region20: #{gqa_forward.7} parent=1 // pred_region
      %s158 = ssub.s32 512, 512
      %159 = vsyncadd [#allocation4], %s158
      %s160 = sshll.u32 [#allocation3], 4
      %s161 = int_to_ptr.vmem [resolvable:$true] %s160
      %166 = dma.vmem_to_hbm [thread:$0]  %s161, 512, %s2, [#allocation4], 128, 128, 8
    $region21: #{gqa_forward.7} parent=1 // pred_fallthru
      _
    // Predicated region
    $region22: #{gqa_forward.7} parent=1 // pred_check
      _
    $region23: #{gqa_forward.7} parent=1 // pred_check_branch
      %168 = sbr.rel (0) target = $region25
    $region24: #{gqa_forward.7} parent=1 // pred_region
      %169 = dma.done [#allocation4], 512
    $region25: #{gqa_forward.7} parent=1 // pred_fallthru
      _
    %170 = vsyncpa [#allocation4], 1

// kernel: gqa_forward.6
$region0: #{gqa_forward.6}
  #allocation0 [shape = 'u32[]', space=smem, size = 0x4, offset = 0x4, fixed_abs, tag = 'smem constant byte address 0x4 - core index']
  #allocation1 [shape = 'u32[144,128]{1,0:T(1,128)}', space=vmem, size = 0x12000, scoped, tag = 'internal scratch']
  #allocation2 [shape = 'f32[32,1]{1,0:T(8,128)}', space=vmem, size = 0x4000, scoped, tag = 'scratch operand']
  #allocation3 [shape = 'f32[32,1]{1,0:T(8,128)}', space=vmem, size = 0x4000, scoped, tag = 'scratch operand']
  #allocation4 [shape = 'f32[32,16]{1,0:T(8,128)}', space=vmem, size = 0x4000, scoped, tag = 'scratch operand']
  #allocation5 [shape = 'bf16[32,16]{1,0:T(16,128)(2,1)}', space=vmem, size = 0x2000, scoped, tag = 'scratch operand']
  %s0 = inlined_call_operand.vmem [shape: bf16[2,4,16,16], index: 0, kind: input, shape index: {}]
  %s1 = inlined_call_operand.vmem [shape: bf16[2,2,16,16], index: 1, kind: input, shape index: {}]
  %s2 = inlined_call_operand.vmem [shape: bf16[2,2,16,16], index: 2, kind: input, shape index: {}]
  %s3 = inlined_call_operand.vmem [shape: f32[16,8], index: 3, kind: input, shape index: {}]
  %s4 = inlined_call_operand.vmem [shape: f32[16,8], index: 4, kind: input, shape index: {}]
  %s5 = inlined_call_operand.vmem [shape: bf16[2,4,16,16], index: 5, kind: output, shape index: {}]
  %s6 = sld [smem:[#allocation0]]
  $region69: #{gqa_forward.6} parent=0
    _
  %s8 = ssub.s32 1, %s6
  %s9 = scalar_select 0, %s8, %s6
  loop: start=0, step=1, limit=6
  $region2: #{gqa_forward.6} parent=0 // loop_pre_header
    _
  $region3: #{gqa_forward.6} parent=0 // loop_header
    %s11 = sphi 0, %s15
    %p12 = scmp.ge.s32.totalorder %s11, 6
    %s18 = sphi 0, %s44
    %s19 = sphi 0, %s40
    %s20 = sphi 0, %s36
    %s21 = sphi 0, %s32
    %s22 = sphi 0, %s18
    %s23 = sphi 0, %s19
    %s24 = sphi 0, %s20
    %s25 = sphi 0, %s21
    %s26 = sphi 0, %s22
    %s27 = sphi 0, %s23
    %s28 = sphi 0, %s24
    %s29 = sphi 0, %s25
    %s51 = sphi 0, %s53
    %s54 = sphi 0, %s51
    %s55 = sphi 0, %s54
    %s71 = sphi 0, %s55
    %s85 = sphi 0, %s87
    %s88 = sphi 0, %s85
    %s89 = sphi 0, %s88
    %s105 = sphi 0, %s89
    %s119 = sphi 0, %s121
    %s122 = sphi 0, %s119
    %s123 = sphi 0, %s122
    %s139 = sphi 0, %s123
    %s145 = sphi 0, %s147
    %s148 = sphi 0, %s145
    %s149 = sphi 0, %s148
    %s165 = sphi 0, %s149
    %s171 = sphi 0, %s173
    %s174 = sphi 0, %s171
    %s175 = sphi 0, %s174
    %s191 = sphi 0, %s175
    %s201 = sphi 0, %s203
    %s204 = sphi 0, %s201
    %s205 = sphi 0, %s204
    %s221 = sphi 0, %s205
  $region4: #{gqa_forward.6} parent=0 // loop_header_branch
    %14 = sbr.rel (%p12) target = $region8
  $region5: #{gqa_forward.6} parent=0 // loop_body
    %s16 = ssub.s32 %s11, 1
    %s17 = ssub.s32 %s11, 2
    %s30 = sadd.s32 1, %s21
    %p31 = scmp.ge.s32.totalorder %s30, 1
    %s32 = scalar_select %p31, 0, %s30
    %s33 = sadd.s32 1, %s20
    %s34 = scalar_select %p31, %s33, %s20
    %p35 = scmp.ge.s32.totalorder %s34, 1
    %s36 = scalar_select %p35, 0, %s34
    %s37 = sadd.s32 1, %s19
    %s38 = scalar_select %p35, %s37, %s19
    %p39 = scmp.ge.s32.totalorder %s38, 2
    %s40 = scalar_select %p39, 0, %s38
    %s41 = sadd.s32 1, %s18
    %s42 = scalar_select %p39, %s41, %s18
    %p43 = scmp.ge.s32.totalorder %s42, 2
    %s44 = scalar_select %p43, 0, %s42
    %s45 = ssub.s32 %s18, %s44
    %s46 = ssub.s32 %s19, %s40
    %s47 = sor.u32 %s45, %s46
    %s48 = ssub.s32 %s20, %s36
    %s49 = sor.u32 %s47, %s48
    %p50 = scmp.eq.s32.totalorder %s49, 0
    %s52 = sadd.s32 %s51, 1
    %s53 = scalar_select %p50, %s51, %s52
    %p56 = pneg %p50
    %p57 = scmp.eq.s32.totalorder %s11, 3
    %p58 = por %p56, %p57
    %p59 = scmp.ne.s32.totalorder %s51, %s54
    %p60 = scmp.eq.s32.totalorder %s11, 0
    %p61 = por %p59, %p60
    %p62 = scmp.ne.s32.totalorder %s51, %s54
    %p63 = scmp.eq.s32.totalorder %s16, 3
    %p64 = por %p62, %p63
    %p65 = scmp.ne.s32.totalorder %s54, %s55
    %p66 = scmp.eq.s32.totalorder %s16, 0
    %p67 = por %p65, %p66
    %p68 = scmp.ne.s32.totalorder %s54, %s55
    %p69 = scmp.eq.s32.totalorder %s17, 3
    %p70 = por %p68, %p69
    %p72 = scmp.ne.s32.totalorder %s55, %s71
    %p73 = scmp.eq.s32.totalorder %s17, 0
    %p74 = por %p72, %p73
    %p75 = scmp.lt.s32.totalorder %s21, %s20
    %s76 = scalar_select %p75, %s21, %s20
    %p77 = scmp.lt.s32.totalorder %s32, %s36
    %s78 = scalar_select %p77, %s32, %s36
    %s79 = ssub.s32 %s18, %s44
    %s80 = ssub.s32 %s19, %s40
    %s81 = sor.u32 %s79, %s80
    %s82 = ssub.s32 %s76, %s78
    %s83 = sor.u32 %s81, %s82
    %p84 = scmp.eq.s32.totalorder %s83, 0
    %s86 = sadd.s32 %s85, 1
    %s87 = scalar_select %p84, %s85, %s86
    %p90 = pneg %p84
    %p91 = scmp.eq.s32.totalorder %s11, 3
    %p92 = por %p90, %p91
    %p93 = scmp.ne.s32.totalorder %s85, %s88
    %p94 = scmp.eq.s32.totalorder %s11, 0
    %p95 = por %p93, %p94
    %p96 = scmp.ne.s32.totalorder %s85, %s88
    %p97 = scmp.eq.s32.totalorder %s16, 3
    %p98 = por %p96, %p97
    %p99 = scmp.ne.s32.totalorder %s88, %s89
    %p100 = scmp.eq.s32.totalorder %s16, 0
    %p101 = por %p99, %p100
    %p102 = scmp.ne.s32.totalorder %s88, %s89
    %p103 = scmp.eq.s32.totalorder %s17, 3
    %p104 = por %p102, %p103
    %p106 = scmp.ne.s32.totalorder %s89, %s105
    %p107 = scmp.eq.s32.totalorder %s17, 0
    %p108 = por %p106, %p107
    %p109 = scmp.lt.s32.totalorder %s21, %s20
    %s110 = scalar_select %p109, %s21, %s20
    %p111 = scmp.lt.s32.totalorder %s32, %s36
    %s112 = scalar_select %p111, %s32, %s36
    %s113 = ssub.s32 %s18, %s44
    %s114 = ssub.s32 %s19, %s40
    %s115 = sor.u32 %s113, %s114
    %s116 = ssub.s32 %s110, %s112
    %s117 = sor.u32 %s115, %s116
    %p118 = scmp.eq.s32.totalorder %s117, 0
    %s120 = sadd.s32 %s119, 1
    %s121 = scalar_select %p118, %s119, %s120
    %p124 = pneg %p118
    %p125 = scmp.eq.s32.totalorder %s11, 3
    %p126 = por %p124, %p125
    %p127 = scmp.ne.s32.totalorder %s119, %s122
    %p128 = scmp.eq.s32.totalorder %s11, 0
    %p129 = por %p127, %p128
    %p130 = scmp.ne.s32.totalorder %s119, %s122
    %p131 = scmp.eq.s32.totalorder %s16, 3
    %p132 = por %p130, %p131
    %p133 = scmp.ne.s32.totalorder %s122, %s123
    %p134 = scmp.eq.s32.totalorder %s16, 0
    %p135 = por %p133, %p134
    %p136 = scmp.ne.s32.totalorder %s122, %s123
    %p137 = scmp.eq.s32.totalorder %s17, 3
    %p138 = por %p136, %p137
    %p140 = scmp.ne.s32.totalorder %s123, %s139
    %p141 = scmp.eq.s32.totalorder %s17, 0
    %p142 = por %p140, %p141
    %s143 = ssub.s32 %s20, %s36
    %p144 = scmp.eq.s32.totalorder %s143, 0
    %s146 = sadd.s32 %s145, 1
    %s147 = scalar_select %p144, %s145, %s146
    %p150 = pneg %p144
    %p151 = scmp.eq.s32.totalorder %s11, 3
    %p152 = por %p150, %p151
    %p153 = scmp.ne.s32.totalorder %s145, %s148
    %p154 = scmp.eq.s32.totalorder %s11, 0
    %p155 = por %p153, %p154
    %p156 = scmp.ne.s32.totalorder %s145, %s148
    %p157 = scmp.eq.s32.totalorder %s16, 3
    %p158 = por %p156, %p157
    %p159 = scmp.ne.s32.totalorder %s148, %s149
    %p160 = scmp.eq.s32.totalorder %s16, 0
    %p161 = por %p159, %p160
    %p162 = scmp.ne.s32.totalorder %s148, %s149
    %p163 = scmp.eq.s32.totalorder %s17, 3
    %p164 = por %p162, %p163
    %p166 = scmp.ne.s32.totalorder %s149, %s165
    %p167 = scmp.eq.s32.totalorder %s17, 0
    %p168 = por %p166, %p167
    %s169 = ssub.s32 %s20, %s36
    %p170 = scmp.eq.s32.totalorder %s169, 0
    %s172 = sadd.s32 %s171, 1
    %s173 = scalar_select %p170, %s171, %s172
    %p176 = pneg %p170
    %p177 = scmp.eq.s32.totalorder %s11, 3
    %p178 = por %p176, %p177
    %p179 = scmp.ne.s32.totalorder %s171, %s174
    %p180 = scmp.eq.s32.totalorder %s11, 0
    %p181 = por %p179, %p180
    %p182 = scmp.ne.s32.totalorder %s171, %s174
    %p183 = scmp.eq.s32.totalorder %s16, 3
    %p184 = por %p182, %p183
    %p185 = scmp.ne.s32.totalorder %s174, %s175
    %p186 = scmp.eq.s32.totalorder %s16, 0
    %p187 = por %p185, %p186
    %p188 = scmp.ne.s32.totalorder %s174, %s175
    %p189 = scmp.eq.s32.totalorder %s17, 3
    %p190 = por %p188, %p189
    %p192 = scmp.ne.s32.totalorder %s175, %s191
    %p193 = scmp.eq.s32.totalorder %s17, 0
    %p194 = por %p192, %p193
    %s195 = ssub.s32 %s18, %s44
    %s196 = ssub.s32 %s19, %s40
    %s197 = sor.u32 %s195, %s196
    %s198 = ssub.s32 %s20, %s36
    %s199 = sor.u32 %s197, %s198
    %p200 = scmp.eq.s32.totalorder %s199, 0
    %s202 = sadd.s32 %s201, 1
    %s203 = scalar_select %p200, %s201, %s202
    %p206 = pneg %p200
    %p207 = scmp.eq.s32.totalorder %s11, 3
    %p208 = por %p206, %p207
    %p209 = scmp.ne.s32.totalorder %s201, %s204
    %p210 = scmp.eq.s32.totalorder %s11, 0
    %p211 = por %p209, %p210
    %p212 = scmp.ne.s32.totalorder %s201, %s204
    %p213 = scmp.eq.s32.totalorder %s16, 3
    %p214 = por %p212, %p213
    %p215 = scmp.ne.s32.totalorder %s204, %s205
    %p216 = scmp.eq.s32.totalorder %s16, 0
    %p217 = por %p215, %p216
    %p218 = scmp.ne.s32.totalorder %s204, %s205
    %p219 = scmp.eq.s32.totalorder %s17, 3
    %p220 = por %p218, %p219
    %p222 = scmp.ne.s32.totalorder %s205, %s221
    %p223 = scmp.eq.s32.totalorder %s17, 0
    %p224 = por %p222, %p223
    %p225 = scmp.le.s32.totalorder 1, %s11
    %p226 = scmp.lt.s32.totalorder %s11, 5
    %p227 = pnand %p225, %p226
    %p228 = pneg %p227
    // Predicated region
    $region9: #{gqa_forward.6} parent=5 // pred_check
      _
    $region10: #{gqa_forward.6} parent=5 // pred_check_branch
      %230 = sbr.rel (%p227) target = $region12
    $region11: #{gqa_forward.6} parent=5 // pred_region
      %s231 = ssub.s32 %s11, 1
      // Predicated region
      $region13: #{gqa_forward.6} parent=11 // pred_check
        %p232 = pneg %p161
      $region14: #{gqa_forward.6} parent=11 // pred_check_branch
        %234 = sbr.rel (%p232) target = $region16
      $region15: #{gqa_forward.6} parent=11 // pred_region
        %s235 = smul.u32 2, %s24
        %p236 = scmp.lt.s32.totalorder %s235, 1
        %s237 = scalar_select %p236, %s235, 1
        %s238 = smul.addr %s237, 8
        %s239 = scalar_lea.vmem %s3, %s238
        %s240 = smul.u32 2, %s24
      $region16: #{gqa_forward.6} parent=11 // pred_fallthru
        _
      // Predicated region
      $region17: #{gqa_forward.6} parent=11 // pred_check
        %p241 = pneg %p187
      $region18: #{gqa_forward.6} parent=11 // pred_check_branch
        %243 = sbr.rel (%p241) target = $region20
      $region19: #{gqa_forward.6} parent=11 // pred_region
        %s244 = smul.u32 2, %s24
        %p245 = scmp.lt.s32.totalorder %s244, 1
        %s246 = scalar_select %p245, %s244, 1
        %s247 = smul.addr %s246, 8
        %s248 = scalar_lea.vmem %s4, %s247
        %s249 = smul.u32 2, %s24
      $region20: #{gqa_forward.6} parent=11 // pred_fallthru
        _
    $region12: #{gqa_forward.6} parent=5 // pred_fallthru
      _
    %p250 = scmp.lt.s32.totalorder %s11, 4
    // Predicated region
    $region21: #{gqa_forward.6} parent=5 // pred_check
      %p251 = pneg %p250
    $region22: #{gqa_forward.6} parent=5 // pred_check_branch
      %253 = sbr.rel (%p251) target = $region24
    $region23: #{gqa_forward.6} parent=5 // pred_region
      // Predicated region
      $region25: #{gqa_forward.6} parent=23 // pred_check
        %p254 = pneg %p61
      $region26: #{gqa_forward.6} parent=23 // pred_check_branch
        %256 = sbr.rel (%p254) target = $region28
      $region27: #{gqa_forward.6} parent=23 // pred_region
        %s257 = smul.u32 2, %s19
        %s258 = smul.u32 2, %s20
        %p259 = scmp.lt.s32.totalorder %s18, 1
        %s260 = scalar_select %p259, %s18, 1
        %p261 = scmp.lt.s32.totalorder %s257, 3
        %s262 = scalar_select %p261, %s257, 3
        %p263 = scmp.lt.s32.totalorder %s258, 1
        %s264 = scalar_select %p263, %s258, 1
        %s265 = smul.addr %s262, 2
        %s266 = sadd.s32 %s264, %s265
        %s267 = smul.addr %s260, 8
        %s268 = sadd.s32 %s266, %s267
        %s269 = smul.addr %s268, 4
        %s270 = scalar_lea.vmem %s0, %s269
        %s271 = smul.u32 2, %s19
        %s272 = smul.u32 2, %s20
      $region28: #{gqa_forward.6} parent=23 // pred_fallthru
        _
      // Predicated region
      $region29: #{gqa_forward.6} parent=23 // pred_check
        %p273 = pneg %p95
      $region30: #{gqa_forward.6} parent=23 // pred_check_branch
        %275 = sbr.rel (%p273) target = $region32
      $region31: #{gqa_forward.6} parent=23 // pred_region
        %p276 = scmp.lt.s32.totalorder %s21, %s20
        %s277 = scalar_select %p276, %s21, %s20
        %s278 = smul.u32 2, %s277
        %p279 = scmp.lt.s32.totalorder %s18, 1
        %s280 = scalar_select %p279, %s18, 1
        %p281 = scmp.lt.s32.totalorder %s19, 1
        %s282 = scalar_select %p281, %s19, 1
        %p283 = scmp.lt.s32.totalorder %s278, 1
        %s284 = scalar_select %p283, %s278, 1
        %s285 = smul.addr %s282, 2
        %s286 = sadd.s32 %s284, %s285
        %s287 = smul.addr %s280, 4
        %s288 = sadd.s32 %s286, %s287
        %s289 = smul.addr %s288, 4
        %s290 = scalar_lea.vmem %s1, %s289
        %p291 = scmp.lt.s32.totalorder %s21, %s20
        %s292 = scalar_select %p291, %s21, %s20
        %s293 = smul.u32 2, %s292
      $region32: #{gqa_forward.6} parent=23 // pred_fallthru
        _
      // Predicated region
      $region33: #{gqa_forward.6} parent=23 // pred_check
        %p294 = pneg %p129
      $region34: #{gqa_forward.6} parent=23 // pred_check_branch
        %296 = sbr.rel (%p294) target = $region36
      $region35: #{gqa_forward.6} parent=23 // pred_region
        %p297 = scmp.lt.s32.totalorder %s21, %s20
        %s298 = scalar_select %p297, %s21, %s20
        %s299 = smul.u32 2, %s298
        %p300 = scmp.lt.s32.totalorder %s18, 1
        %s301 = scalar_select %p300, %s18, 1
        %p302 = scmp.lt.s32.totalorder %s19, 1
        %s303 = scalar_select %p302, %s19, 1
        %p304 = scmp.lt.s32.totalorder %s299, 1
        %s305 = scalar_select %p304, %s299, 1
        %s306 = smul.addr %s303, 2
        %s307 = sadd.s32 %s305, %s306
        %s308 = smul.addr %s301, 4
        %s309 = sadd.s32 %s307, %s308
        %s310 = smul.addr %s309, 4
        %s311 = scalar_lea.vmem %s2, %s310
        %p312 = scmp.lt.s32.totalorder %s21, %s20
        %s313 = scalar_select %p312, %s21, %s20
        %s314 = smul.u32 2, %s313
      $region36: #{gqa_forward.6} parent=23 // pred_fallthru
        _
    $region24: #{gqa_forward.6} parent=5 // pred_fallthru
      _
    %p315 = scmp.le.s32.totalorder 1, %s11
    %p316 = scmp.lt.s32.totalorder %s11, 5
    %p317 = pnand %p315, %p316
    %p318 = pneg %p317
    // Predicated region
    $region37: #{gqa_forward.6} parent=5 // pred_check
      _
    $region38: #{gqa_forward.6} parent=5 // pred_check_branch
      %320 = sbr.rel (%p317) target = $region40
    $region39: #{gqa_forward.6} parent=5 // pred_region
      %s321 = ssub.s32 %s11, 1
      %s322 = smul.u32 2, %s23
      %s323 = smul.u32 2, %s24
      %p324 = scmp.lt.s32.totalorder %s22, 1
      %s325 = scalar_select %p324, %s22, 1
      %p326 = scmp.lt.s32.totalorder %s322, 3
      %s327 = scalar_select %p326, %s322, 3
      %p328 = scmp.lt.s32.totalorder %s323, 1
      %s329 = scalar_select %p328, %s323, 1
      %s330 = smul.addr %s327, 2
      %s331 = sadd.s32 %s329, %s330
      %s332 = smul.addr %s325, 8
      %s333 = sadd.s32 %s331, %s332
      %s334 = smul.addr %s333, 4
      %s335 = scalar_lea.vmem %s0, %s334
      %p336 = pneg %p67
      %p337 = pneg %p64
      %p338 = scmp.lt.s32.totalorder %s25, %s24
      %s339 = scalar_select %p338, %s25, %s24
      %s340 = smul.u32 2, %s339
      %p341 = scmp.lt.s32.totalorder %s22, 1
      %s342 = scalar_select %p341, %s22, 1
      %p343 = scmp.lt.s32.totalorder %s23, 1
      %s344 = scalar_select %p343, %s23, 1
      %p345 = scmp.lt.s32.totalorder %s340, 1
      %s346 = scalar_select %p345, %s340, 1
      %s347 = smul.addr %s344, 2
      %s348 = sadd.s32 %s346, %s347
      %s349 = smul.addr %s342, 4
      %s350 = sadd.s32 %s348, %s349
      %s351 = smul.addr %s350, 4
      %s352 = scalar_lea.vmem %s1, %s351
      %p353 = pneg %p101
      %p354 = pneg %p98
      %p355 = scmp.lt.s32.totalorder %s25, %s24
      %s356 = scalar_select %p355, %s25, %s24
      %s357 = smul.u32 2, %s356
      %p358 = scmp.lt.s32.totalorder %s22, 1
      %s359 = scalar_select %p358, %s22, 1
      %p360 = scmp.lt.s32.totalorder %s23, 1
      %s361 = scalar_select %p360, %s23, 1
      %p362 = scmp.lt.s32.totalorder %s357, 1
      %s363 = scalar_select %p362, %s357, 1
      %s364 = smul.addr %s361, 2
      %s365 = sadd.s32 %s363, %s364
      %s366 = smul.addr %s359, 4
      %s367 = sadd.s32 %s365, %s366
      %s368 = smul.addr %s367, 4
      %s369 = scalar_lea.vmem %s2, %s368
      %p370 = pneg %p135
      %p371 = pneg %p132
      %s372 = smul.u32 2, %s24
      %p373 = scmp.lt.s32.totalorder %s372, 1
      %s374 = scalar_select %p373, %s372, 1
      %s375 = smul.addr %s374, 8
      %s376 = scalar_lea.vmem %s3, %s375
      %p377 = pneg %p161
      %p378 = pneg %p158
      %s379 = smul.u32 2, %s24
      %p380 = scmp.lt.s32.totalorder %s379, 1
      %s381 = scalar_select %p380, %s379, 1
      %s382 = smul.addr %s381, 8
      %s383 = scalar_lea.vmem %s4, %s382
      %p384 = pneg %p187
      %p385 = pneg %p184
      %p386 = pneg %p217
      %p387 = pneg %p214
      %s388 = smul.u32 2, %s23
      %s389 = smul.u32 2, %s24
      %p390 = scmp.lt.s32.totalorder %s22, 1
      %s391 = scalar_select %p390, %s22, 1
      %p392 = scmp.lt.s32.totalorder %s388, 3
      %s393 = scalar_select %p392, %s388, 3
      %p394 = scmp.lt.s32.totalorder %s389, 1
      %s395 = scalar_select %p394, %s389, 1
      %s396 = smul.addr %s393, 2
      %s397 = sadd.s32 %s395, %s396
      %s398 = smul.addr %s391, 8
      %s399 = sadd.s32 %s397, %s398
      %s400 = smul.addr %s399, 4
      %s401 = scalar_lea.vmem %s5, %s400
      %s402 = smul.u32 2, %s23
      %s403 = smul.u32 2, %s24
      %p404 = scmp.lt.s32.totalorder %s22, 1
      %s405 = scalar_select %p404, %s22, 1
      %p406 = scmp.lt.s32.totalorder %s402, 3
      %s407 = scalar_select %p406, %s402, 3
      %p408 = scmp.lt.s32.totalorder %s403, 1
      %s409 = scalar_select %p408, %s403, 1
      %s410 = smul.addr %s407, 2
      %s411 = sadd.s32 %s409, %s410
      %s412 = smul.addr %s405, 8
      %s413 = sadd.s32 %s411, %s412
      %s414 = smul.addr %s413, 4
      %s415 = scalar_lea.vmem %s0, %s414
      %s416 = smul.u32 2, %s23
      %s417 = smul.u32 2, %s24
      %p418 = scmp.lt.s32.totalorder %s25, %s24
      %s419 = scalar_select %p418, %s25, %s24
      %s420 = smul.u32 2, %s419
      %p421 = scmp.lt.s32.totalorder %s22, 1
      %s422 = scalar_select %p421, %s22, 1
      %p423 = scmp.lt.s32.totalorder %s23, 1
      %s424 = scalar_select %p423, %s23, 1
      %p425 = scmp.lt.s32.totalorder %s420, 1
      %s426 = scalar_select %p425, %s420, 1
      %s427 = smul.addr %s424, 2
      %s428 = sadd.s32 %s426, %s427
      %s429 = smul.addr %s422, 4
      %s430 = sadd.s32 %s428, %s429
      %s431 = smul.addr %s430, 4
      %s432 = scalar_lea.vmem %s1, %s431
      %p433 = scmp.lt.s32.totalorder %s25, %s24
      %s434 = scalar_select %p433, %s25, %s24
      %s435 = smul.u32 2, %s434
      %p436 = scmp.lt.s32.totalorder %s25, %s24
      %s437 = scalar_select %p436, %s25, %s24
      %s438 = smul.u32 2, %s437
      %p439 = scmp.lt.s32.totalorder %s22, 1
      %s440 = scalar_select %p439, %s22, 1
      %p441 = scmp.lt.s32.totalorder %s23, 1
      %s442 = scalar_select %p441, %s23, 1
      %p443 = scmp.lt.s32.totalorder %s438, 1
      %s444 = scalar_select %p443, %s438, 1
      %s445 = smul.addr %s442, 2
      %s446 = sadd.s32 %s444, %s445
      %s447 = smul.addr %s440, 4
      %s448 = sadd.s32 %s446, %s447
      %s449 = smul.addr %s448, 4
      %s450 = scalar_lea.vmem %s2, %s449
      %p451 = scmp.lt.s32.totalorder %s25, %s24
      %s452 = scalar_select %p451, %s25, %s24
      %s453 = smul.u32 2, %s452
      %s454 = smul.u32 2, %s24
      %p455 = scmp.lt.s32.totalorder %s454, 1
      %s456 = scalar_select %p455, %s454, 1
      %s457 = smul.addr %s456, 8
      %s458 = scalar_lea.vmem %s3, %s457
      %s459 = smul.u32 2, %s24
      %s460 = smul.u32 2, %s24
      %p461 = scmp.lt.s32.totalorder %s460, 1
      %s462 = scalar_select %p461, %s460, 1
      %s463 = smul.addr %s462, 8
      %s464 = scalar_lea.vmem %s4, %s463
      %s465 = smul.u32 2, %s24
      %s466 = smul.u32 2, %s23
      %s467 = smul.u32 2, %s24
      %p468 = scmp.lt.s32.totalorder %s22, 1
      %s469 = scalar_select %p468, %s22, 1
      %p470 = scmp.lt.s32.totalorder %s466, 3
      %s471 = scalar_select %p470, %s466, 3
      %p472 = scmp.lt.s32.totalorder %s467, 1
      %s473 = scalar_select %p472, %s467, 1
      %s474 = smul.addr %s471, 2
      %s475 = sadd.s32 %s473, %s474
      %s476 = smul.addr %s469, 8
      %s477 = sadd.s32 %s475, %s476
      %s478 = smul.addr %s477, 4
      %s479 = scalar_lea.vmem %s5, %s478
      %s480 = smul.u32 2, %s23
      %s481 = smul.u32 2, %s24
      %p483 = scmp.eq.s32.totalorder %s25, 0
      // Predicated region
      $region41: #{gqa_forward.6} parent=39 // pred_check
        %p484 = pneg %p483
      $region42: #{gqa_forward.6} parent=39 // pred_check_branch
        %486 = sbr.rel (%p484) target = $region44
      $region43: #{gqa_forward.6} parent=39 // pred_region
        %v487 = vld [vmem:[%s415] sm:$0xf]
        %v488 = vld [vmem:[%s415 + $0x4] sm:$0xf]
        %v489 = vld [vmem:[%s415 + $0x8] sm:$0xf]
        %v490 = vld [vmem:[%s415 + $0xc] sm:$0xf]
        %v491 = vunpack.c.l.bf16 %v487
        %v492 = vunpack.c.l.bf16 %v488
        %v493 = vunpack.c.l.bf16 %v489
        %v494 = vunpack.c.l.bf16 %v490
        %v495 = vld [vmem:[%s458] sm:$0xff]
        %v496 = vld [vmem:[%s458 + $0x8] sm:$0xff]
        %v497 = vld [vmem:[%s464] sm:$0xff]
        %v498 = vld [vmem:[%s464 + $0x8] sm:$0xff]
        %v499 = vmul.f32 %v491, %v495
        %v500 = vmul.f32 %v492, %v496
        %v501 = vmul.f32 %v493, %v495
        %v502 = vmul.f32 %v494, %v496
        %505 = vrot.lane.b32.xlu0 %v497, 8
        %v506 = vpop.permute.xlu0 %505
        %507 = vrot.lane.b32.xlu0 %v498, 8
        %v508 = vpop.permute.xlu0 %507
        %v511 = vmul.f32 %v491, %v506
        %v512 = vmul.f32 %v492, %v508
        %v513 = vmul.f32 %v493, %v506
        %v514 = vmul.f32 %v494, %v508
        %519 = vrot.lane.b32.xlu0 %v511, 120
        %v520 = vpop.permute.xlu0 %519
        %521 = vrot.lane.b32.xlu0 %v512, 120
        %v522 = vpop.permute.xlu0 %521
        %523 = vrot.lane.b32.xlu0 %v513, 120
        %v524 = vpop.permute.xlu0 %523
        %525 = vrot.lane.b32.xlu0 %v514, 120
        %v526 = vpop.permute.xlu0 %525
        %v531 = vsub.f32 %v499, %v520
        %v532 = vsub.f32 %v500, %v522
        %v533 = vsub.f32 %v501, %v524
        %v534 = vsub.f32 %v502, %v526
        %537 = vrot.lane.b32.xlu0 %v495, 8
        %v538 = vpop.permute.xlu0 %537
        %539 = vrot.lane.b32.xlu0 %v496, 8
        %v540 = vpop.permute.xlu0 %539
        %v543 = vmul.f32 %v491, %v538
        %v544 = vmul.f32 %v492, %v540
        %v545 = vmul.f32 %v493, %v538
        %v546 = vmul.f32 %v494, %v540
        %v547 = vmul.f32 %v491, %v497
        %v548 = vmul.f32 %v492, %v498
        %v549 = vmul.f32 %v493, %v497
        %v550 = vmul.f32 %v494, %v498
        %555 = vrot.lane.b32.xlu0 %v547, 8
        %v556 = vpop.permute.xlu0 %555
        %557 = vrot.lane.b32.xlu0 %v548, 8
        %v558 = vpop.permute.xlu0 %557
        %559 = vrot.lane.b32.xlu0 %v549, 8
        %v560 = vpop.permute.xlu0 %559
        %561 = vrot.lane.b32.xlu0 %v550, 8
        %v562 = vpop.permute.xlu0 %561
        %v567 = vadd.f32 %v543, %v556
        %v568 = vadd.f32 %v544, %v558
        %v569 = vadd.f32 %v545, %v560
        %v570 = vadd.f32 %v546, %v562
        %vm571 = vcmask 64512
        %v572 = vsel %vm571, %v531, %v567
        %v573 = vsel %vm571, %v532, %v568
        %v574 = vsel %vm571, %v533, %v569
        %v575 = vsel %vm571, %v534, %v570
        %v576 = vpack.c.bf16 %v573, %v572
        %v577 = vpack.c.bf16 %v575, %v574
        %vm578 = vcmask 130048
        %579 = vst.msk [vmem:[#allocation5] sm:$0xff] %vm578, %v576
        %580 = vst.msk [vmem:[#allocation5 + $0x8] sm:$0xff] %vm578, %v577
        %vm581 = vcmask 7168
        %582 = vst.msk [vmem:[#allocation2] sm:$0xff] %vm581, -1e+30
        %583 = vst.msk [vmem:[#allocation2 + $0x8] sm:$0xff] %vm581, -1e+30
        %584 = vst.msk [vmem:[#allocation2 + $0x10] sm:$0xff] %vm581, -1e+30
        %585 = vst.msk [vmem:[#allocation2 + $0x18] sm:$0xff] %vm581, -1e+30
        %586 = vst.msk [vmem:[#allocation3] sm:$0xff] %vm581, 0.0
        %587 = vst.msk [vmem:[#allocation3 + $0x8] sm:$0xff] %vm581, 0.0
        %588 = vst.msk [vmem:[#allocation3 + $0x10] sm:$0xff] %vm581, 0.0
        %589 = vst.msk [vmem:[#allocation3 + $0x18] sm:$0xff] %vm581, 0.0
        %590 = vst.msk [vmem:[#allocation4] sm:$0xff] %vm578, 0.0
        %591 = vst.msk [vmem:[#allocation4 + $0x8] sm:$0xff] %vm578, 0.0
        %592 = vst.msk [vmem:[#allocation4 + $0x10] sm:$0xff] %vm578, 0.0
        %593 = vst.msk [vmem:[#allocation4 + $0x18] sm:$0xff] %vm578, 0.0
      $region44: #{gqa_forward.6} parent=39 // pred_fallthru
        _
      %p594 = scmp.lt.s32.totalorder %s25, %s24
      // Predicated region
      $region45: #{gqa_forward.6} parent=39 // pred_check
        %p595 = pneg %p594
      $region46: #{gqa_forward.6} parent=39 // pred_check_branch
        %597 = sbr.rel (%p595) target = $region48
      $region47: #{gqa_forward.6} parent=39 // pred_region
        %v598 = vld [vmem:[#allocation5] sm:$0xff]
        %v599 = vld [vmem:[#allocation5 + $0x8] sm:$0xff]
        %v600 = vld [vmem:[%s432] sm:$0xf]
        %v601 = vld [vmem:[%s432 + $0x4] sm:$0xf]
        %v602 = vld [vmem:[%s450] sm:$0xf]
        %v603 = vld [vmem:[%s450 + $0x4] sm:$0xf]
        %v606 = vunpack.c.l.b16 %v600
        %v607 = vunpack.c.l.b16 %v601
        %v608 = vpack.c.b16 %v607, %v606
        %vm609 = vcmask 130048
        %v611 = vsel %vm609, %v598, 0
        %v614 = vsel %vm609, %v599, 0
        %v617 = vsel %vm609, %v608, 0
        %619 = vmatprep.subr.bf16.mxu0 0
        %620 = vmatpush1.bf16.xpose.msra.mxu0 %v617
        %621 = vmatprep.subr.bf16.mxu0 0
        %622 = vmatpush1.bf16.xpose.msra.mxu0 0
        %623 = vmatprep.subr.bf16.mxu0 0
        %624 = vmatpush1.bf16.xpose.msra.mxu0 0
        %625 = vmatprep.subr.bf16.mxu0 0
        %626 = vmatpush1.bf16.xpose.msra.mxu0 0
        %627 = vmatprep.subr.bf16.mxu0 0
        %628 = vmatpush1.bf16.xpose.msra.mxu0 0
        %629 = vmatprep.subr.bf16.mxu0 0
        %630 = vmatpush1.bf16.xpose.msra.mxu0 0
        %631 = vmatprep.subr.bf16.mxu0 0
        %632 = vmatpush1.bf16.xpose.msra.mxu0 0
        %633 = vmatprep.subr.bf16.mxu0 0
        %634 = vmatpush1.bf16.xpose.msra.mxu0 0
        %635 = vmatprep.subr.bf16.mxu0 0
        %636 = vmatpush1.bf16.xpose.msra.mxu0 0
        %637 = vmatprep.subr.bf16.mxu0 0
        %638 = vmatpush1.bf16.xpose.msra.mxu0 0
        %639 = vmatprep.subr.bf16.mxu0 0
        %640 = vmatpush1.bf16.xpose.msra.mxu0 0
        %641 = vmatprep.subr.bf16.mxu0 0
        %642 = vmatpush1.bf16.xpose.msra.mxu0 0
        %643 = vmatprep.subr.bf16.mxu0 0
        %644 = vmatpush1.bf16.xpose.msra.mxu0 0
        %645 = vmatprep.subr.bf16.mxu0 0
        %646 = vmatpush1.bf16.xpose.msra.mxu0 0
        %647 = vmatprep.subr.bf16.mxu0 0
        %648 = vmatpush1.bf16.xpose.msra.mxu0 0
        %649 = vmatprep.subr.bf16.mxu0 0
        %650 = vmatpush1.bf16.xpose.msra.mxu0 0
        %651 = vmatprep.mubr.bf16.mxu0 0
        %652 = vmatmul.mubr.bf16.gmra.mrb[0].mxu0 %v611
        %v653 = vpop.f32.mrb[0].mxu0
        %v654 = vadd.f32 0.0, %v653
        %v655 = vpop.f32.mrb[0].mxu0
        %v656 = vpop.f32.mrb[0].mxu0
        %v657 = vadd.f32 0.0, %v656
        %v658 = vpop.f32.mrb[0].mxu0
        %659 = vmatprep.mubr.bf16.mxu0 0
        %660 = vmatmul.mubr.bf16.gmra.mrb[0].mxu0 %v614
        %v661 = vpop.f32.mrb[0].mxu0
        %v662 = vadd.f32 0.0, %v661
        %v663 = vpop.f32.mrb[0].mxu0
        %v664 = vpop.f32.mrb[0].mxu0
        %v665 = vadd.f32 0.0, %v664
        %v666 = vpop.f32.mrb[0].mxu0
        %667 = vdwg.mxu0
        %v668 = vld [vmem:[#allocation2] sm:$0xff]
        %v669 = vld [vmem:[#allocation2 + $0x8] sm:$0xff]
        %v670 = vld [vmem:[#allocation2 + $0x10] sm:$0xff]
        %v671 = vld [vmem:[#allocation2 + $0x18] sm:$0xff]
        %v672 = vsel %vm609, %v654, -inf
        %673 = vmax.xlane.f32.xlu0 %v672
        %v674 = vpop.xlane.xlu0 %673
        %v675 = vsel %vm609, %v657, -inf
        %676 = vmax.xlane.f32.xlu0 %v675
        %v677 = vpop.xlane.xlu0 %676
        %v678 = vsel %vm609, %v662, -inf
        %679 = vmax.xlane.f32.xlu0 %v678
        %v680 = vpop.xlane.xlu0 %679
        %v681 = vsel %vm609, %v665, -inf
        %682 = vmax.xlane.f32.xlu0 %v681
        %v683 = vpop.xlane.xlu0 %682
        %v684 = vmax.f32 %v668, %v674
        %v685 = vmax.f32 %v669, %v677
        %v686 = vmax.f32 %v670, %v680
        %v687 = vmax.f32 %v671, %v683
        %v688 = vsub.f32 %v668, %v684
        %v689 = vsub.f32 %v669, %v685
        %v690 = vsub.f32 %v670, %v686
        %v691 = vsub.f32 %v671, %v687
        %v692 = vmul.f32 %v688, 1.442695
        %v693 = vpow.pop %v692
        %v694 = vmul.f32 %v689, 1.442695
        %v695 = vpow.pop %v694
        %v696 = vmul.f32 %v690, 1.442695
        %v697 = vpow.pop %v696
        %v698 = vmul.f32 %v691, 1.442695
        %v699 = vpow.pop %v698
        %701 = vset.pattern.permute.xlu0 0
        %702 = vperm.xlu0 %701, %v684
        %v703 = vpop.permute.xlu0 %702
        %706 = vset.pattern.permute.xlu0 0
        %707 = vperm.xlu0 %706, %v685
        %v708 = vpop.permute.xlu0 %707
        %711 = vset.pattern.permute.xlu0 0
        %712 = vperm.xlu0 %711, %v686
        %v713 = vpop.permute.xlu0 %712
        %716 = vset.pattern.permute.xlu0 0
        %717 = vperm.xlu0 %716, %v687
        %v718 = vpop.permute.xlu0 %717
        %v720 = vsub.f32 %v654, %v703
        %v721 = vsub.f32 %v657, %v708
        %v722 = vsub.f32 %v662, %v713
        %v723 = vsub.f32 %v665, %v718
        %v724 = vmul.f32 %v720, 1.442695
        %v725 = vpow.pop %v724
        %v726 = vmul.f32 %v721, 1.442695
        %v727 = vpow.pop %v726
        %v728 = vmul.f32 %v722, 1.442695
        %v729 = vpow.pop %v728
        %v730 = vmul.f32 %v723, 1.442695
        %v731 = vpow.pop %v730
        %v732 = vld [vmem:[#allocation3] sm:$0xff]
        %v733 = vld [vmem:[#allocation3 + $0x8] sm:$0xff]
        %v734 = vld [vmem:[#allocation3 + $0x10] sm:$0xff]
        %v735 = vld [vmem:[#allocation3 + $0x18] sm:$0xff]
        %v736 = vmul.f32 %v693, %v732
        %v737 = vmul.f32 %v695, %v733
        %v738 = vmul.f32 %v697, %v734
        %v739 = vmul.f32 %v699, %v735
        %v740 = vsel %vm609, %v725, 0.0
        %741 = vadd.xlane.f32.xlu0 %v740
        %v742 = vpop.xlane.xlu0 %741
        %v743 = vsel %vm609, %v727, 0.0
        %744 = vadd.xlane.f32.xlu0 %v743
        %v745 = vpop.xlane.xlu0 %744
        %v746 = vsel %vm609, %v729, 0.0
        %747 = vadd.xlane.f32.xlu0 %v746
        %v748 = vpop.xlane.xlu0 %747
        %v749 = vsel %vm609, %v731, 0.0
        %750 = vadd.xlane.f32.xlu0 %v749
        %v751 = vpop.xlane.xlu0 %750
        %v752 = vadd.f32 %v736, %v742
        %v753 = vadd.f32 %v737, %v745
        %v754 = vadd.f32 %v738, %v748
        %v755 = vadd.f32 %v739, %v751
        %vm756 = vcmask 7168
        %757 = vst.msk [vmem:[#allocation3] sm:$0xff] %vm756, %v752
        %758 = vst.msk [vmem:[#allocation3 + $0x8] sm:$0xff] %vm756, %v753
        %759 = vst.msk [vmem:[#allocation3 + $0x10] sm:$0xff] %vm756, %v754
        %760 = vst.msk [vmem:[#allocation3 + $0x18] sm:$0xff] %vm756, %v755
        %v761 = vld [vmem:[#allocation4] sm:$0xff]
        %v762 = vld [vmem:[#allocation4 + $0x8] sm:$0xff]
        %v763 = vld [vmem:[#allocation4 + $0x10] sm:$0xff]
        %v764 = vld [vmem:[#allocation4 + $0x18] sm:$0xff]
        %766 = vset.pattern.permute.xlu0 0
        %767 = vperm.xlu0 %766, %v693
        %v768 = vpop.permute.xlu0 %767
        %771 = vset.pattern.permute.xlu0 0
        %772 = vperm.xlu0 %771, %v695
        %v773 = vpop.permute.xlu0 %772
        %776 = vset.pattern.permute.xlu0 0
        %777 = vperm.xlu0 %776, %v697
        %v778 = vpop.permute.xlu0 %777
        %781 = vset.pattern.permute.xlu0 0
        %782 = vperm.xlu0 %781, %v699
        %v783 = vpop.permute.xlu0 %782
        %v785 = vmul.f32 %v768, %v761
        %v786 = vmul.f32 %v773, %v762
        %v787 = vmul.f32 %v778, %v763
        %v788 = vmul.f32 %v783, %v764
        %v789 = vpack.c.bf16 %v727, %v725
        %v790 = vpack.c.bf16 %v731, %v729
        %v793 = vunpack.c.l.b16 %v602
        %v794 = vunpack.c.l.b16 %v603
        %v795 = vpack.c.b16 %v794, %v793
        %v798 = vsel %vm609, %v789, 0
        %v801 = vsel %vm609, %v790, 0
        %803 = vmatprep.subr.bf16.mxu0 0
        %804 = vmatpush1.bf16.msra.mxu0 %v795
        %805 = vmatprep.subr.bf16.mxu0 0
        %806 = vmatpush1.bf16.msra.mxu0 0
        %807 = vmatprep.subr.bf16.mxu0 0
        %808 = vmatpush1.bf16.msra.mxu0 0
        %809 = vmatprep.subr.bf16.mxu0 0
        %810 = vmatpush1.bf16.msra.mxu0 0
        %811 = vmatprep.subr.bf16.mxu0 0
        %812 = vmatpush1.bf16.msra.mxu0 0
        %813 = vmatprep.subr.bf16.mxu0 0
        %814 = vmatpush1.bf16.msra.mxu0 0
        %815 = vmatprep.subr.bf16.mxu0 0
        %816 = vmatpush1.bf16.msra.mxu0 0
        %817 = vmatprep.subr.bf16.mxu0 0
        %818 = vmatpush1.bf16.msra.mxu0 0
        %819 = vmatprep.subr.bf16.mxu0 0
        %820 = vmatpush1.bf16.msra.mxu0 0
        %821 = vmatprep.subr.bf16.mxu0 0
        %822 = vmatpush1.bf16.msra.mxu0 0
        %823 = vmatprep.subr.bf16.mxu0 0
        %824 = vmatpush1.bf16.msra.mxu0 0
        %825 = vmatprep.subr.bf16.mxu0 0
        %826 = vmatpush1.bf16.msra.mxu0 0
        %827 = vmatprep.subr.bf16.mxu0 0
        %828 = vmatpush1.bf16.msra.mxu0 0
        %829 = vmatprep.subr.bf16.mxu0 0
        %830 = vmatpush1.bf16.msra.mxu0 0
        %831 = vmatprep.subr.bf16.mxu0 0
        %832 = vmatpush1.bf16.msra.mxu0 0
        %833 = vmatprep.subr.bf16.mxu0 0
        %834 = vmatpush1.bf16.msra.mxu0 0
        %835 = vmatprep.mubr.bf16.mxu0 0
        %836 = vmatmul.mubr.bf16.gmra.mrb[0].mxu0 %v798
        %v837 = vpop.f32.mrb[0].mxu0
        %v838 = vadd.f32 0.0, %v837
        %v839 = vpop.f32.mrb[0].mxu0
        %v840 = vpop.f32.mrb[0].mxu0
        %v841 = vadd.f32 0.0, %v840
        %v842 = vpop.f32.mrb[0].mxu0
        %843 = vmatprep.mubr.bf16.mxu0 0
        %844 = vmatmul.mubr.bf16.gmra.mrb[0].mxu0 %v801
        %v845 = vpop.f32.mrb[0].mxu0
        %v846 = vadd.f32 0.0, %v845
        %v847 = vpop.f32.mrb[0].mxu0
        %v848 = vpop.f32.mrb[0].mxu0
        %v849 = vadd.f32 0.0, %v848
        %v850 = vpop.f32.mrb[0].mxu0
        %851 = vdwg.mxu0
        %v852 = vadd.f32 %v785, %v838
        %v853 = vadd.f32 %v786, %v841
        %v854 = vadd.f32 %v787, %v846
        %v855 = vadd.f32 %v788, %v849
        %856 = vst.msk [vmem:[#allocation4] sm:$0xff] %vm609, %v852
        %857 = vst.msk [vmem:[#allocation4 + $0x8] sm:$0xff] %vm609, %v853
        %858 = vst.msk [vmem:[#allocation4 + $0x10] sm:$0xff] %vm609, %v854
        %859 = vst.msk [vmem:[#allocation4 + $0x18] sm:$0xff] %vm609, %v855
        %860 = vst.msk [vmem:[#allocation2] sm:$0xff] %vm756, %v684
        %861 = vst.msk [vmem:[#allocation2 + $0x8] sm:$0xff] %vm756, %v685
        %862 = vst.msk [vmem:[#allocation2 + $0x10] sm:$0xff] %vm756, %v686
        %863 = vst.msk [vmem:[#allocation2 + $0x18] sm:$0xff] %vm756, %v687
      $region48: #{gqa_forward.6} parent=39 // pred_fallthru
        _
      %p864 = scmp.eq.s32.totalorder %s25, %s24
      // Predicated region
      $region49: #{gqa_forward.6} parent=39 // pred_check
        %p865 = pneg %p864
      $region50: #{gqa_forward.6} parent=39 // pred_check_branch
        %867 = sbr.rel (%p865) target = $region52
      $region51: #{gqa_forward.6} parent=39 // pred_region
        %v868 = vld [vmem:[#allocation5] sm:$0xff]
        %v869 = vld [vmem:[#allocation5 + $0x8] sm:$0xff]
        %v870 = vld [vmem:[%s432] sm:$0xf]
        %v871 = vld [vmem:[%s432 + $0x4] sm:$0xf]
        %v872 = vld [vmem:[%s450] sm:$0xf]
        %v873 = vld [vmem:[%s450 + $0x4] sm:$0xf]
        %v876 = vunpack.c.l.b16 %v870
        %v877 = vunpack.c.l.b16 %v871
        %v878 = vpack.c.b16 %v877, %v876
        %vm879 = vcmask 130048
        %v881 = vsel %vm879, %v868, 0
        %v884 = vsel %vm879, %v869, 0
        %v887 = vsel %vm879, %v878, 0
        %889 = vmatprep.subr.bf16.mxu0 0
        %890 = vmatpush1.bf16.xpose.msra.mxu0 %v887
        %891 = vmatprep.subr.bf16.mxu0 0
        %892 = vmatpush1.bf16.xpose.msra.mxu0 0
        %893 = vmatprep.subr.bf16.mxu0 0
        %894 = vmatpush1.bf16.xpose.msra.mxu0 0
        %895 = vmatprep.subr.bf16.mxu0 0
        %896 = vmatpush1.bf16.xpose.msra.mxu0 0
        %897 = vmatprep.subr.bf16.mxu0 0
        %898 = vmatpush1.bf16.xpose.msra.mxu0 0
        %899 = vmatprep.subr.bf16.mxu0 0
        %900 = vmatpush1.bf16.xpose.msra.mxu0 0
        %901 = vmatprep.subr.bf16.mxu0 0
        %902 = vmatpush1.bf16.xpose.msra.mxu0 0
        %903 = vmatprep.subr.bf16.mxu0 0
        %904 = vmatpush1.bf16.xpose.msra.mxu0 0
        %905 = vmatprep.subr.bf16.mxu0 0
        %906 = vmatpush1.bf16.xpose.msra.mxu0 0
        %907 = vmatprep.subr.bf16.mxu0 0
        %908 = vmatpush1.bf16.xpose.msra.mxu0 0
        %909 = vmatprep.subr.bf16.mxu0 0
        %910 = vmatpush1.bf16.xpose.msra.mxu0 0
        %911 = vmatprep.subr.bf16.mxu0 0
        %912 = vmatpush1.bf16.xpose.msra.mxu0 0
        %913 = vmatprep.subr.bf16.mxu0 0
        %914 = vmatpush1.bf16.xpose.msra.mxu0 0
        %915 = vmatprep.subr.bf16.mxu0 0
        %916 = vmatpush1.bf16.xpose.msra.mxu0 0
        %917 = vmatprep.subr.bf16.mxu0 0
        %918 = vmatpush1.bf16.xpose.msra.mxu0 0
        %919 = vmatprep.subr.bf16.mxu0 0
        %920 = vmatpush1.bf16.xpose.msra.mxu0 0
        %921 = vmatprep.mubr.bf16.mxu0 0
        %922 = vmatmul.mubr.bf16.gmra.mrb[0].mxu0 %v881
        %v923 = vpop.f32.mrb[0].mxu0
        %v924 = vadd.f32 0.0, %v923
        %v925 = vpop.f32.mrb[0].mxu0
        %v926 = vpop.f32.mrb[0].mxu0
        %v927 = vadd.f32 0.0, %v926
        %v928 = vpop.f32.mrb[0].mxu0
        %929 = vmatprep.mubr.bf16.mxu0 0
        %930 = vmatmul.mubr.bf16.gmra.mrb[0].mxu0 %v884
        %v931 = vpop.f32.mrb[0].mxu0
        %v932 = vadd.f32 0.0, %v931
        %v933 = vpop.f32.mrb[0].mxu0
        %v934 = vpop.f32.mrb[0].mxu0
        %v935 = vadd.f32 0.0, %v934
        %v936 = vpop.f32.mrb[0].mxu0
        %937 = vdwg.mxu0
        %v938 = vlaneseq
        %v939 = vshrl.u32 %v938, 7
        %v940 = vadd.s32 %v939, 8
        %v941 = vadd.s32 %v939, 16
        %v942 = vadd.s32 %v939, 24
        %s943 = smul.u32 %s24, 16
        %vm944 = vcmp.lt.s32.totalorder %v939, 0
        %v945 = vsub.s32 0, %v939
        %v946 = vsel %vm944, %v945, %v939
        %v947 = vshrl.u32 %v946, 4
        %v948 = vand.u32 %v946, 15
        %v949 = vsub.s32 0, %v948
        %v950 = vsel %vm944, %v949, %v948
        %vm951 = vcmp.lt.s32.totalorder %v940, 0
        %v952 = vsub.s32 0, %v940
        %v953 = vsel %vm951, %v952, %v940
        %v954 = vshrl.u32 %v953, 4
        %v955 = vand.u32 %v953, 15
        %v956 = vsub.s32 0, %v955
        %v957 = vsel %vm951, %v956, %v955
        %vm958 = vcmp.lt.s32.totalorder %v941, 0
        %v959 = vsub.s32 0, %v941
        %v960 = vsel %vm958, %v959, %v941
        %v961 = vshrl.u32 %v960, 4
        %v962 = vand.u32 %v960, 15
        %v963 = vsub.s32 0, %v962
        %v964 = vsel %vm958, %v963, %v962
        %vm965 = vcmp.lt.s32.totalorder %v942, 0
        %v966 = vsub.s32 0, %v942
        %v967 = vsel %vm965, %v966, %v942
        %v968 = vshrl.u32 %v967, 4
        %v969 = vand.u32 %v967, 15
        %v970 = vsub.s32 0, %v969
        %v971 = vsel %vm965, %v970, %v969
        %vm972 = vcmp.ne.s32.totalorder %v950, 0
        %vm973 = vcmp.ne.s32.totalorder %v957, 0
        %vm974 = vcmp.ne.s32.totalorder %v964, 0
        %vm975 = vcmp.ne.s32.totalorder %v971, 0
        %vm976 = vcmp.lt.s32.totalorder %v950, 0
        %vm977 = vcmp.lt.s32.totalorder %v957, 0
        %vm978 = vcmp.lt.s32.totalorder %v964, 0
        %vm979 = vcmp.lt.s32.totalorder %v971, 0
        %vm980 = vmand %vm976, %vm972
        %vm981 = vmand %vm977, %vm973
        %vm982 = vmand %vm978, %vm974
        %vm983 = vmand %vm979, %vm975
        %v984 = vadd.s32 %v950, 16
        %v985 = vadd.s32 %v957, 16
        %v986 = vadd.s32 %v964, 16
        %v987 = vadd.s32 %v971, 16
        %v988 = vsel %vm980, %v984, %v950
        %v989 = vsel %vm981, %v985, %v957
        %v990 = vsel %vm982, %v986, %v964
        %v991 = vsel %vm983, %v987, %v971
        %v992 = vstv %s943
        %v993 = vadd.s32 %v992, %v988
        %v994 = vadd.s32 %v992, %v989
        %v995 = vadd.s32 %v992, %v990
        %v996 = vadd.s32 %v992, %v991
        %s997 = smul.u32 %s25, 16
        %v998 = vlaneseq
        %v999 = vand.u32 %v998, 127
        %v1000 = vstv %s997
        %v1001 = vadd.s32 %v1000, %v999
        %vm1002 = vcmp.ge.s32.totalorder %v993, %v1001
        %vm1003 = vcmp.ge.s32.totalorder %v994, %v1001
        %vm1004 = vcmp.ge.s32.totalorder %v995, %v1001
        %vm1005 = vcmp.ge.s32.totalorder %v996, %v1001
        %v1006 = vsel %vm1002, %v924, -1e+30
        %v1007 = vsel %vm1003, %v927, -1e+30
        %v1008 = vsel %vm1004, %v932, -1e+30
        %v1009 = vsel %vm1005, %v935, -1e+30
        %v1010 = vld [vmem:[#allocation2] sm:$0xff]
        %v1011 = vld [vmem:[#allocation2 + $0x8] sm:$0xff]
        %v1012 = vld [vmem:[#allocation2 + $0x10] sm:$0xff]
        %v1013 = vld [vmem:[#allocation2 + $0x18] sm:$0xff]
        %v1014 = vsel %vm879, %v1006, -inf
        %1015 = vmax.xlane.f32.xlu0 %v1014
        %v1016 = vpop.xlane.xlu0 %1015
        %v1017 = vsel %vm879, %v1007, -inf
        %1018 = vmax.xlane.f32.xlu0 %v1017
        %v1019 = vpop.xlane.xlu0 %1018
        %v1020 = vsel %vm879, %v1008, -inf
        %1021 = vmax.xlane.f32.xlu0 %v1020
        %v1022 = vpop.xlane.xlu0 %1021
        %v1023 = vsel %vm879, %v1009, -inf
        %1024 = vmax.xlane.f32.xlu0 %v1023
        %v1025 = vpop.xlane.xlu0 %1024
        %v1026 = vmax.f32 %v1010, %v1016
        %v1027 = vmax.f32 %v1011, %v1019
        %v1028 = vmax.f32 %v1012, %v1022
        %v1029 = vmax.f32 %v1013, %v1025
        %v1030 = vsub.f32 %v1010, %v1026
        %v1031 = vsub.f32 %v1011, %v1027
        %v1032 = vsub.f32 %v1012, %v1028
        %v1033 = vsub.f32 %v1013, %v1029
        %v1034 = vmul.f32 %v1030, 1.442695
        %v1035 = vpow.pop %v1034
        %v1036 = vmul.f32 %v1031, 1.442695
        %v1037 = vpow.pop %v1036
        %v1038 = vmul.f32 %v1032, 1.442695
        %v1039 = vpow.pop %v1038
        %v1040 = vmul.f32 %v1033, 1.442695
        %v1041 = vpow.pop %v1040
        %1043 = vset.pattern.permute.xlu0 0
        %1044 = vperm.xlu0 %1043, %v1026
        %v1045 = vpop.permute.xlu0 %1044
        %1048 = vset.pattern.permute.xlu0 0
        %1049 = vperm.xlu0 %1048, %v1027
        %v1050 = vpop.permute.xlu0 %1049
        %1053 = vset.pattern.permute.xlu0 0
        %1054 = vperm.xlu0 %1053, %v1028
        %v1055 = vpop.permute.xlu0 %1054
        %1058 = vset.pattern.permute.xlu0 0
        %1059 = vperm.xlu0 %1058, %v1029
        %v1060 = vpop.permute.xlu0 %1059
        %v1062 = vsub.f32 %v1006, %v1045
        %v1063 = vsub.f32 %v1007, %v1050
        %v1064 = vsub.f32 %v1008, %v1055
        %v1065 = vsub.f32 %v1009, %v1060
        %v1066 = vmul.f32 %v1062, 1.442695
        %v1067 = vpow.pop %v1066
        %v1068 = vmul.f32 %v1063, 1.442695
        %v1069 = vpow.pop %v1068
        %v1070 = vmul.f32 %v1064, 1.442695
        %v1071 = vpow.pop %v1070
        %v1072 = vmul.f32 %v1065, 1.442695
        %v1073 = vpow.pop %v1072
        %v1074 = vld [vmem:[#allocation3] sm:$0xff]
        %v1075 = vld [vmem:[#allocation3 + $0x8] sm:$0xff]
        %v1076 = vld [vmem:[#allocation3 + $0x10] sm:$0xff]
        %v1077 = vld [vmem:[#allocation3 + $0x18] sm:$0xff]
        %v1078 = vmul.f32 %v1035, %v1074
        %v1079 = vmul.f32 %v1037, %v1075
        %v1080 = vmul.f32 %v1039, %v1076
        %v1081 = vmul.f32 %v1041, %v1077
        %v1082 = vsel %vm879, %v1067, 0.0
        %1083 = vadd.xlane.f32.xlu0 %v1082
        %v1084 = vpop.xlane.xlu0 %1083
        %v1085 = vsel %vm879, %v1069, 0.0
        %1086 = vadd.xlane.f32.xlu0 %v1085
        %v1087 = vpop.xlane.xlu0 %1086
        %v1088 = vsel %vm879, %v1071, 0.0
        %1089 = vadd.xlane.f32.xlu0 %v1088
        %v1090 = vpop.xlane.xlu0 %1089
        %v1091 = vsel %vm879, %v1073, 0.0
        %1092 = vadd.xlane.f32.xlu0 %v1091
        %v1093 = vpop.xlane.xlu0 %1092
        %v1094 = vadd.f32 %v1078, %v1084
        %v1095 = vadd.f32 %v1079, %v1087
        %v1096 = vadd.f32 %v1080, %v1090
        %v1097 = vadd.f32 %v1081, %v1093
        %vm1098 = vcmask 7168
        %1099 = vst.msk [vmem:[#allocation3] sm:$0xff] %vm1098, %v1094
        %1100 = vst.msk [vmem:[#allocation3 + $0x8] sm:$0xff] %vm1098, %v1095
        %1101 = vst.msk [vmem:[#allocation3 + $0x10] sm:$0xff] %vm1098, %v1096
        %1102 = vst.msk [vmem:[#allocation3 + $0x18] sm:$0xff] %vm1098, %v1097
        %v1103 = vld [vmem:[#allocation4] sm:$0xff]
        %v1104 = vld [vmem:[#allocation4 + $0x8] sm:$0xff]
        %v1105 = vld [vmem:[#allocation4 + $0x10] sm:$0xff]
        %v1106 = vld [vmem:[#allocation4 + $0x18] sm:$0xff]
        %1108 = vset.pattern.permute.xlu0 0
        %1109 = vperm.xlu0 %1108, %v1035
        %v1110 = vpop.permute.xlu0 %1109
        %1113 = vset.pattern.permute.xlu0 0
        %1114 = vperm.xlu0 %1113, %v1037
        %v1115 = vpop.permute.xlu0 %1114
        %1118 = vset.pattern.permute.xlu0 0
        %1119 = vperm.xlu0 %1118, %v1039
        %v1120 = vpop.permute.xlu0 %1119
        %1123 = vset.pattern.permute.xlu0 0
        %1124 = vperm.xlu0 %1123, %v1041
        %v1125 = vpop.permute.xlu0 %1124
        %v1127 = vmul.f32 %v1110, %v1103
        %v1128 = vmul.f32 %v1115, %v1104
        %v1129 = vmul.f32 %v1120, %v1105
        %v1130 = vmul.f32 %v1125, %v1106
        %v1131 = vpack.c.bf16 %v1069, %v1067
        %v1132 = vpack.c.bf16 %v1073, %v1071
        %v1135 = vunpack.c.l.b16 %v872
        %v1136 = vunpack.c.l.b16 %v873
        %v1137 = vpack.c.b16 %v1136, %v1135
        %v1140 = vsel %vm879, %v1131, 0
        %v1143 = vsel %vm879, %v1132, 0
        %1145 = vmatprep.subr.bf16.mxu0 0
        %1146 = vmatpush1.bf16.msra.mxu0 %v1137
        %1147 = vmatprep.subr.bf16.mxu0 0
        %1148 = vmatpush1.bf16.msra.mxu0 0
        %1149 = vmatprep.subr.bf16.mxu0 0
        %1150 = vmatpush1.bf16.msra.mxu0 0
        %1151 = vmatprep.subr.bf16.mxu0 0
        %1152 = vmatpush1.bf16.msra.mxu0 0
        %1153 = vmatprep.subr.bf16.mxu0 0
        %1154 = vmatpush1.bf16.msra.mxu0 0
        %1155 = vmatprep.subr.bf16.mxu0 0
        %1156 = vmatpush1.bf16.msra.mxu0 0
        %1157 = vmatprep.subr.bf16.mxu0 0
        %1158 = vmatpush1.bf16.msra.mxu0 0
        %1159 = vmatprep.subr.bf16.mxu0 0
        %1160 = vmatpush1.bf16.msra.mxu0 0
        %1161 = vmatprep.subr.bf16.mxu0 0
        %1162 = vmatpush1.bf16.msra.mxu0 0
        %1163 = vmatprep.subr.bf16.mxu0 0
        %1164 = vmatpush1.bf16.msra.mxu0 0
        %1165 = vmatprep.subr.bf16.mxu0 0
        %1166 = vmatpush1.bf16.msra.mxu0 0
        %1167 = vmatprep.subr.bf16.mxu0 0
        %1168 = vmatpush1.bf16.msra.mxu0 0
        %1169 = vmatprep.subr.bf16.mxu0 0
        %1170 = vmatpush1.bf16.msra.mxu0 0
        %1171 = vmatprep.subr.bf16.mxu0 0
        %1172 = vmatpush1.bf16.msra.mxu0 0
        %1173 = vmatprep.subr.bf16.mxu0 0
        %1174 = vmatpush1.bf16.msra.mxu0 0
        %1175 = vmatprep.subr.bf16.mxu0 0
        %1176 = vmatpush1.bf16.msra.mxu0 0
        %1177 = vmatprep.mubr.bf16.mxu0 0
        %1178 = vmatmul.mubr.bf16.gmra.mrb[0].mxu0 %v1140
        %v1179 = vpop.f32.mrb[0].mxu0
        %v1180 = vadd.f32 0.0, %v1179
        %v1181 = vpop.f32.mrb[0].mxu0
        %v1182 = vpop.f32.mrb[0].mxu0
        %v1183 = vadd.f32 0.0, %v1182
        %v1184 = vpop.f32.mrb[0].mxu0
        %1185 = vmatprep.mubr.bf16.mxu0 0
        %1186 = vmatmul.mubr.bf16.gmra.mrb[0].mxu0 %v1143
        %v1187 = vpop.f32.mrb[0].mxu0
        %v1188 = vadd.f32 0.0, %v1187
        %v1189 = vpop.f32.mrb[0].mxu0
        %v1190 = vpop.f32.mrb[0].mxu0
        %v1191 = vadd.f32 0.0, %v1190
        %v1192 = vpop.f32.mrb[0].mxu0
        %1193 = vdwg.mxu0
        %v1194 = vadd.f32 %v1127, %v1180
        %v1195 = vadd.f32 %v1128, %v1183
        %v1196 = vadd.f32 %v1129, %v1188
        %v1197 = vadd.f32 %v1130, %v1191
        %1198 = vst.msk [vmem:[#allocation4] sm:$0xff] %vm879, %v1194
        %1199 = vst.msk [vmem:[#allocation4 + $0x8] sm:$0xff] %vm879, %v1195
        %1200 = vst.msk [vmem:[#allocation4 + $0x10] sm:$0xff] %vm879, %v1196
        %1201 = vst.msk [vmem:[#allocation4 + $0x18] sm:$0xff] %vm879, %v1197
        %1202 = vst.msk [vmem:[#allocation2] sm:$0xff] %vm1098, %v1026
        %1203 = vst.msk [vmem:[#allocation2 + $0x8] sm:$0xff] %vm1098, %v1027
        %1204 = vst.msk [vmem:[#allocation2 + $0x10] sm:$0xff] %vm1098, %v1028
        %1205 = vst.msk [vmem:[#allocation2 + $0x18] sm:$0xff] %vm1098, %v1029
      $region52: #{gqa_forward.6} parent=39 // pred_fallthru
        _
      // Predicated region
      $region53: #{gqa_forward.6} parent=39 // pred_check
        %p1206 = pneg %p483
      $region54: #{gqa_forward.6} parent=39 // pred_check_branch
        %1208 = sbr.rel (%p1206) target = $region56
      $region55: #{gqa_forward.6} parent=39 // pred_region
        %v1209 = vld [vmem:[#allocation3] sm:$0xff]
        %v1210 = vld [vmem:[#allocation3 + $0x8] sm:$0xff]
        %v1211 = vld [vmem:[#allocation3 + $0x10] sm:$0xff]
        %v1212 = vld [vmem:[#allocation3 + $0x18] sm:$0xff]
        %v1213 = vrcp.pop %v1209
        %v1214 = vrcp.pop %v1210
        %v1215 = vrcp.pop %v1211
        %v1216 = vrcp.pop %v1212
        %v1217 = vld [vmem:[#allocation4] sm:$0xff]
        %v1218 = vld [vmem:[#allocation4 + $0x8] sm:$0xff]
        %v1219 = vld [vmem:[#allocation4 + $0x10] sm:$0xff]
        %v1220 = vld [vmem:[#allocation4 + $0x18] sm:$0xff]
        %1222 = vset.pattern.permute.xlu0 0
        %1223 = vperm.xlu0 %1222, %v1213
        %v1224 = vpop.permute.xlu0 %1223
        %1227 = vset.pattern.permute.xlu0 0
        %1228 = vperm.xlu0 %1227, %v1214
        %v1229 = vpop.permute.xlu0 %1228
        %1232 = vset.pattern.permute.xlu0 0
        %1233 = vperm.xlu0 %1232, %v1215
        %v1234 = vpop.permute.xlu0 %1233
        %1237 = vset.pattern.permute.xlu0 0
        %1238 = vperm.xlu0 %1237, %v1216
        %v1239 = vpop.permute.xlu0 %1238
        %v1241 = vmul.f32 %v1217, %v1224
        %v1242 = vmul.f32 %v1218, %v1229
        %v1243 = vmul.f32 %v1219, %v1234
        %v1244 = vmul.f32 %v1220, %v1239
        %v1245 = vpack.c.bf16 %v1242, %v1241
        %v1246 = vpack.c.bf16 %v1244, %v1243
        %v1249 = vunpack.c.l.b16 %v1245
        %v1250 = vunpack.c.h.b16 %v1245
        %v1251 = vunpack.c.l.b16 %v1246
        %v1252 = vunpack.c.h.b16 %v1246
        %v1253 = vpack.c.b16 %v1249, %v1249
        %v1254 = vpack.c.b16 %v1250, %v1250
        %v1255 = vpack.c.b16 %v1251, %v1251
        %v1256 = vpack.c.b16 %v1252, %v1252
        %vm1261 = vcmask 125952
        %1262 = vst.msk [vmem:[%s479] sm:$0xf] %vm1261, %v1253
        %1263 = vst.msk [vmem:[%s479 + $0x4] sm:$0xf] %vm1261, %v1254
        %1264 = vst.msk [vmem:[%s479 + $0x8] sm:$0xf] %vm1261, %v1255
        %1265 = vst.msk [vmem:[%s479 + $0xc] sm:$0xf] %vm1261, %v1256
      $region56: #{gqa_forward.6} parent=39 // pred_fallthru
        _
      %s1266 = smul.u32 2, %s23
      %s1267 = smul.u32 2, %s24
      %p1268 = scmp.lt.s32.totalorder %s22, 1
      %s1269 = scalar_select %p1268, %s22, 1
      %p1270 = scmp.lt.s32.totalorder %s1266, 3
      %s1271 = scalar_select %p1270, %s1266, 3
      %p1272 = scmp.lt.s32.totalorder %s1267, 1
      %s1273 = scalar_select %p1272, %s1267, 1
      %s1274 = smul.addr %s1271, 2
      %s1275 = sadd.s32 %s1273, %s1274
      %s1276 = smul.addr %s1269, 8
      %s1277 = sadd.s32 %s1275, %s1276
      %s1278 = smul.addr %s1277, 4
      %s1279 = scalar_lea.vmem %s5, %s1278
      // Predicated region
      $region57: #{gqa_forward.6} parent=39 // pred_check
        %p1280 = pneg %p214
      $region58: #{gqa_forward.6} parent=39 // pred_check_branch
        %1282 = sbr.rel (%p1280) target = $region60
      $region59: #{gqa_forward.6} parent=39 // pred_region
        %s1283 = smul.u32 2, %s23
        %s1284 = smul.u32 2, %s24
      $region60: #{gqa_forward.6} parent=39 // pred_fallthru
        _
    $region40: #{gqa_forward.6} parent=5 // pred_fallthru
      _
    %p1285 = scmp.le.s32.totalorder 2, %s11
    // Predicated region
    $region61: #{gqa_forward.6} parent=5 // pred_check
      %p1286 = pneg %p1285
    $region62: #{gqa_forward.6} parent=5 // pred_check_branch
      %1288 = sbr.rel (%p1286) target = $region64
    $region63: #{gqa_forward.6} parent=5 // pred_region
      %s1289 = ssub.s32 %s11, 2
      // Predicated region
      $region65: #{gqa_forward.6} parent=63 // pred_check
        %p1290 = pneg %p220
      $region66: #{gqa_forward.6} parent=63 // pred_check_branch
        %1292 = sbr.rel (%p1290) target = $region68
      $region67: #{gqa_forward.6} parent=63 // pred_region
        %s1293 = smul.u32 2, %s27
        %s1294 = smul.u32 2, %s28
        %p1295 = scmp.lt.s32.totalorder %s26, 1
        %s1296 = scalar_select %p1295, %s26, 1
        %p1297 = scmp.lt.s32.totalorder %s1293, 3
        %s1298 = scalar_select %p1297, %s1293, 3
        %p1299 = scmp.lt.s32.totalorder %s1294, 1
        %s1300 = scalar_select %p1299, %s1294, 1
        %s1301 = smul.addr %s1298, 2
        %s1302 = sadd.s32 %s1300, %s1301
        %s1303 = smul.addr %s1296, 8
        %s1304 = sadd.s32 %s1302, %s1303
        %s1305 = smul.addr %s1304, 4
        %s1306 = scalar_lea.vmem %s5, %s1305
      $region68: #{gqa_forward.6} parent=63 // pred_fallthru
        _
    $region64: #{gqa_forward.6} parent=5 // pred_fallthru
      _
  $region6: #{gqa_forward.6} parent=0 // loop_footer
    %s15 = sadd.s32 1, %s11
  $region7: #{gqa_forward.6} parent=0 // loop_footer_branch
    %10 = sbr.rel target = $region3
  $region8: #{gqa_forward.6} parent=0 // loop_exit
    _

</llo_original>
